<compile_context>
chip_gen: v7x
topology: tpu7x:2x2x1
jax: 0.10.0
libtpu: 0.0.40
codegen_flags: <defaults>
</compile_context>

<pallas_src>
import functools

import jax
import jax.numpy as jnp
from jax import lax
from jax.experimental import pallas as pl
from jax.experimental.pallas import tpu as pltpu


def _instance_norm(y, eps=1e-5):
    # y: (C, HW); per-channel biased variance over the spatial axis (two-pass).
    m = jnp.mean(y, axis=-1, keepdims=True)
    d = y - m
    var = jnp.mean(d * d, axis=-1, keepdims=True)
    return d * lax.rsqrt(var + eps)


def _conv3x3_reflect(x, w_ref, H, W, masks):
    """3x3 conv, stride 1, ReflectionPad2d(1), on a lane-flattened (Ci, H*W) slab.

    x: (Ci, HW) f32.  w_ref: (9, Co, Ci) bf16 ref with leading index k = ky*3+kx.
    Returns (Co, HW) f32.  No bias (cancelled exactly by the following
    non-affine InstanceNorm).
    """
    row0, rowl, col0, coll = masks
    HW = H * W
    Co = w_ref.shape[1]

    def rot(a, s):
        # out[i] = a[(i - s) mod HW]  (jnp.roll semantics; XLU lane rotation)
        return pltpu.roll(a, shift=s % HW, axis=1)

    x_dn = rot(x, W)        # out[idx] = x[idx - W]  (value of the row above)
    x_up = rot(x, HW - W)   # out[idx] = x[idx + W]  (value of the row below)
    rows = (
        jnp.where(row0, x_up, x_dn),   # ky = 0: x[row-1], reflect row 0 -> row 1
        x,                             # ky = 1
        jnp.where(rowl, x_dn, x_up),   # ky = 2: x[row+1], reflect row H-1 -> H-2
    )

    acc = jnp.zeros((Co, HW), jnp.float32)
    k = 0
    for r in rows:
        r_dn = rot(r, 1)        # out[idx] = r[idx - 1]  (col to the left)
        r_up = rot(r, HW - 1)   # out[idx] = r[idx + 1]  (col to the right)
        col_taps = (
            jnp.where(col0, r_up, r_dn),   # kx = 0: reflect col 0 -> col 1
            r,                             # kx = 1
            jnp.where(coll, r_dn, r_up),   # kx = 2: reflect col W-1 -> W-2
        )
        for tap in col_taps:
            # Cast each tap to bf16 as it is produced; one small MXU matmul per
            # tap, f32 accumulation.  Tap dies immediately after the dot.
            acc = acc + jnp.dot(w_ref[k], tap.astype(jnp.bfloat16),
                                preferred_element_type=jnp.float32)
            k += 1
    return acc


def resblock_kernel(x_ref, code_ref, w1_ref, w2_ref, o_ref, *, H, W):
    x = x_ref[0]              # (C, HW) f32
    code = code_ref[...]      # (1, HW) int32 packed border flags
    masks = ((code & 1) != 0,   # row == 0
             (code & 2) != 0,   # row == H-1
             (code & 4) != 0,   # col == 0
             (code & 8) != 0)   # col == W-1

    # Conv1 -> InstanceNorm -> ReLU   (Dropout(0.5) in eval mode == identity)
    h = _conv3x3_reflect(x, w1_ref, H, W, masks)
    h = _instance_norm(h)
    h = jnp.maximum(h, 0.0)

    # Conv2 -> InstanceNorm
    h = _conv3x3_reflect(h, w2_ref, H, W, masks)
    h = _instance_norm(h)

    # Residual add
    o_ref[0] = (x + h).astype(o_ref.dtype)


def _vmem_capacity_bytes():
    try:
        return int(pltpu.get_tpu_info().vmem_capacity_bytes)
    except Exception:
        return 64 * 2 ** 20   # conservative fallback, valid on every chip


@jax.jit
def resblock(x, w1, b1, w2, b2):
    # b1 / b2 are accepted for module-signature parity but are mathematically
    # dead: a per-channel constant bias is exactly removed by the following
    # non-affine InstanceNorm (mean subtraction), so it is not computed.
    del b1, b2
    B, C, H, W = x.shape
    HW = H * W

    # Lane-dense spatial layout.
    x_flat = x.reshape(B, C, HW)

    # Weight re-layout: (Co, Ci, 3, 3) -> (9, Co, Ci) with leading index
    # k = ky*3 + kx, matching the tap generation order.  bf16 MXU operands.
    w1f = jnp.transpose(w1, (2, 3, 0, 1)).reshape(9, C, C).astype(jnp.bfloat16)
    w2f = jnp.transpose(w2, (2, 3, 0, 1)).reshape(9, C, C).astype(jnp.bfloat16)

    # Host-precomputed packed border flags for the flattened slab
    # (avoids in-kernel integer div/mod and two separate index operands).
    idx = jnp.arange(HW, dtype=jnp.int32)
    row = idx // W
    col = idx % W
    code = ((row == 0).astype(jnp.int32)
            | ((row == H - 1).astype(jnp.int32) << 1)
            | ((col == 0).astype(jnp.int32) << 2)
            | ((col == W - 1).astype(jnp.int32) << 3)).reshape(1, HW)

    flops = B * 2 * (2 * 9 * C * C * HW)              # two 3x3 convs per sample
    bytes_accessed = (2 * B * C * HW * 4              # x in + out
                      + 2 * 9 * C * C * 2             # both weight stacks (bf16)
                      + HW * 4)                        # border code
    cost = pl.CostEstimate(flops=flops, transcendentals=2 * B * C,
                           bytes_accessed=bytes_accessed)

    # VMEM budget (per-tap version): double-buffered x/out blocks, weights and
    # border code (default 2-deep pipelining), plus in-kernel temporaries
    # (~3 row taps + 1 tap + bf16 copy + acc + norm temps ≈ 12 slabs of C*HW f32).
    per_step = (2 * (2 * C * HW * 4)          # x block in + out block, 2-buffered
                + 2 * (2 * 9 * C * C * 2)     # both weight stacks, 2-buffered
                + 2 * HW * 4                  # border code, 2-buffered
                + 12 * C * HW * 4)            # in-kernel temporaries
    # Target ~85% of physical VMEM as the ceiling (≈54 MiB on v7x's 64 MiB,
    # ≈108 MiB on v5e/v6e's 128 MiB), never below the 32 MiB scoped default.
    vmem_cap = int(0.85 * _vmem_capacity_bytes())
    vmem_limit = int(min(vmem_cap, max(32 * 2 ** 20, per_step)))

    out_flat = pl.pallas_call(
        functools.partial(resblock_kernel, H=H, W=W),
        out_shape=jax.ShapeDtypeStruct((B, C, HW), x.dtype),
        grid_spec=pltpu.PrefetchScalarGridSpec(
            num_scalar_prefetch=0,
            grid=(B,),
            in_specs=[
                pl.BlockSpec((1, C, HW), lambda b: (b, 0, 0)),
                pl.BlockSpec((1, HW), lambda b: (0, 0)),
                pl.BlockSpec((9, C, C), lambda b: (0, 0, 0)),
                pl.BlockSpec((9, C, C), lambda b: (0, 0, 0)),
            ],
            out_specs=pl.BlockSpec((1, C, HW), lambda b: (b, 0, 0)),
        ),
        compiler_params=pltpu.CompilerParams(
            dimension_semantics=("parallel",),
            vmem_limit_bytes=vmem_limit),
        cost_estimate=cost,
    )(x_flat, code, w1f, w2f)
    return out_flat.reshape(B, C, H, W)


def resblock_reference(x, w1, b1, w2, b2):
    # Pure-JAX (f32) reference for correctness checking — includes the conv bias,
    # which the kernel omits (exactly cancelled by the non-affine InstanceNorm).
    def conv(a, w, b):
        a = jnp.pad(a, ((0, 0), (0, 0), (1, 1), (1, 1)), mode="reflect")
        y = lax.conv_general_dilated(
            a, w, window_strides=(1, 1), padding="VALID",
            dimension_numbers=("NCHW", "OIHW", "NCHW"))
        return y + b[None, :, None, None]

    def inorm(y, eps=1e-5):
        m = y.mean(axis=(2, 3), keepdims=True)
        v = ((y - m) ** 2).mean(axis=(2, 3), keepdims=True)
        return (y - m) / jnp.sqrt(v + eps)

    h = jax.nn.relu(inorm(conv(x, w1, b1)))
    h = inorm(conv(h, w2, b2))
    return x + h


if __name__ == "__main__":
    B, C, H, W = 2, 4, 16, 16

    key = jax.random.PRNGKey(0)
    kx, kw1, kb1, kw2, kb2 = jax.random.split(key, 5)

    # Deterministic init mimicking nn.Conv2d default (uniform(-1/sqrt(fan_in), +)).
    fan_in = C * 3 * 3
    bound = 1.0 / (fan_in ** 0.5)
    w1 = jax.random.uniform(kw1, (C, C, 3, 3), jnp.float32, -bound, bound)
    b1 = jax.random.uniform(kb1, (C,), jnp.float32, -bound, bound)
    w2 = jax.random.uniform(kw2, (C, C, 3, 3), jnp.float32, -bound, bound)
    b2 = jax.random.uniform(kb2, (C,), jnp.float32, -bound, bound)

    x = jax.random.normal(kx, (B, C, H, W), jnp.float32)

    out = jax.block_until_ready(resblock(x, w1, b1, w2, b2))
    ref = jax.block_until_ready(resblock_reference(x, w1, b1, w2, b2))

    assert out.shape == (B, C, H, W)
    # Tolerance loosened vs pure-f32 because matmul operands are bf16 (f32 acc);
    # structural errors (wrong tap / norm / residual / bias handling) would be
    # O(1), far above this.
    err = float(jnp.max(jnp.abs(out - ref)))
    assert jnp.allclose(out, ref, atol=1e-1, rtol=1e-2), f"max abs err = {err}"

    print("KERNEL_OK")
</pallas_src>

<mosaic_0001>
module attributes {stable_mosaic.version = 11 : i64} {
  func.func @resblock_kernel(%arg0: i32, %arg1: memref<1x4x256xf32, #tpu.memory_space<vmem>>, %arg2: memref<1x256xi32, #tpu.memory_space<vmem>>, %arg3: memref<9x4x4xbf16, #tpu.memory_space<vmem>>, %arg4: memref<9x4x4xbf16, #tpu.memory_space<vmem>>, %arg5: memref<1x4x256xf32, #tpu.memory_space<vmem>>) attributes {dimension_semantics = [#tpu.dimension_semantics<parallel>], iteration_bounds = array<i64: 2>, scalar_prefetch = 0 : i64, scratch_operands = 0 : i64, tpu.core_type = #tpu.core_type<tc>, window_params = [{transform_indices = @transform_0, window_bounds = array<i64: 1, 4, 256>}, {pipeline_mode = #tpu.pipeline_mode<synchronous>, transform_indices = @transform_1, window_bounds = array<i64: 1, 256>}, {pipeline_mode = #tpu.pipeline_mode<synchronous>, transform_indices = @transform_2, window_bounds = array<i64: 9, 4, 4>}, {pipeline_mode = #tpu.pipeline_mode<synchronous>, transform_indices = @transform_3, window_bounds = array<i64: 9, 4, 4>}, {transform_indices = @transform_4, window_bounds = array<i64: 1, 4, 256>}]} {
    %c0 = arith.constant 0 : index
    %c0_0 = arith.constant 0 : index
    %c0_1 = arith.constant 0 : index
    %0 = vector.load %arg1[%c0, %c0_0, %c0_1] : memref<1x4x256xf32, #tpu.memory_space<vmem>>, vector<1x4x256xf32>
    %1 = vector.shape_cast %0 : vector<1x4x256xf32> to vector<4x256xf32>
    %c0_2 = arith.constant 0 : index
    %c0_3 = arith.constant 0 : index
    %2 = vector.load %arg2[%c0_2, %c0_3] : memref<1x256xi32, #tpu.memory_space<vmem>>, vector<1x256xi32>
    %c1_i32 = arith.constant 1 : i32
    %3 = vector.broadcast %c1_i32 : i32 to vector<1x256xi32>
    %4 = arith.andi %2, %3 : vector<1x256xi32>
    %c0_i32 = arith.constant 0 : i32
    %5 = vector.broadcast %c0_i32 : i32 to vector<1x256xi32>
    %6 = arith.cmpi ne, %4, %5 : vector<1x256xi32>
    %c2_i32 = arith.constant 2 : i32
    %7 = vector.broadcast %c2_i32 : i32 to vector<1x256xi32>
    %8 = arith.andi %2, %7 : vector<1x256xi32>
    %c0_i32_4 = arith.constant 0 : i32
    %9 = vector.broadcast %c0_i32_4 : i32 to vector<1x256xi32>
    %10 = arith.cmpi ne, %8, %9 : vector<1x256xi32>
    %c4_i32 = arith.constant 4 : i32
    %11 = vector.broadcast %c4_i32 : i32 to vector<1x256xi32>
    %12 = arith.andi %2, %11 : vector<1x256xi32>
    %c0_i32_5 = arith.constant 0 : i32
    %13 = vector.broadcast %c0_i32_5 : i32 to vector<1x256xi32>
    %14 = arith.cmpi ne, %12, %13 : vector<1x256xi32>
    %c8_i32 = arith.constant 8 : i32
    %15 = vector.broadcast %c8_i32 : i32 to vector<1x256xi32>
    %16 = arith.andi %2, %15 : vector<1x256xi32>
    %c0_i32_6 = arith.constant 0 : i32
    %17 = vector.broadcast %c0_i32_6 : i32 to vector<1x256xi32>
    %18 = arith.cmpi ne, %16, %17 : vector<1x256xi32>
    %c16_i32 = arith.constant 16 : i32
    %19 = tpu.dynamic_rotate %1 by %c16_i32 dim 1 : vector<4x256xf32>, i32 -> vector<4x256xf32>
    %c240_i32 = arith.constant 240 : i32
    %20 = tpu.dynamic_rotate %1 by %c240_i32 dim 1 : vector<4x256xf32>, i32 -> vector<4x256xf32>
    %21 = vector.shape_cast %6 : vector<1x256xi1> to vector<1x256xi1>
    %22 = vector.broadcast %21 : vector<1x256xi1> to vector<4x256xi1>
    %23 = arith.select %22, %20, %19 : vector<4x256xi1>, vector<4x256xf32>
    %24 = vector.shape_cast %10 : vector<1x256xi1> to vector<1x256xi1>
    %25 = vector.broadcast %24 : vector<1x256xi1> to vector<4x256xi1>
    %26 = arith.select %25, %19, %20 : vector<4x256xi1>, vector<4x256xf32>
    %cst = arith.constant 0.000000e+00 : f32
    %27 = vector.broadcast %cst : f32 to vector<4x256xf32>
    %c1_i32_7 = arith.constant 1 : i32
    %28 = tpu.dynamic_rotate %23 by %c1_i32_7 dim 1 : vector<4x256xf32>, i32 -> vector<4x256xf32>
    %c255_i32 = arith.constant 255 : i32
    %29 = tpu.dynamic_rotate %23 by %c255_i32 dim 1 : vector<4x256xf32>, i32 -> vector<4x256xf32>
    %30 = vector.shape_cast %14 : vector<1x256xi1> to vector<1x256xi1>
    %31 = vector.broadcast %30 : vector<1x256xi1> to vector<4x256xi1>
    %32 = arith.select %31, %29, %28 : vector<4x256xi1>, vector<4x256xf32>
    %33 = vector.shape_cast %18 : vector<1x256xi1> to vector<1x256xi1>
    %34 = vector.broadcast %33 : vector<1x256xi1> to vector<4x256xi1>
    %35 = arith.select %34, %28, %29 : vector<4x256xi1>, vector<4x256xf32>
    %c0_8 = arith.constant 0 : index
    %c0_9 = arith.constant 0 : index
    %c0_10 = arith.constant 0 : index
    %36 = vector.load %arg3[%c0_8, %c0_9, %c0_10] : memref<9x4x4xbf16, #tpu.memory_space<vmem>>, vector<1x4x4xbf16>
    %37 = vector.shape_cast %36 : vector<1x4x4xbf16> to vector<4x4xbf16>
    %38 = arith.truncf %32 : vector<4x256xf32> to vector<4x256xbf16>
    %cst_11 = arith.constant dense<0.000000e+00> : vector<4x256xf32>
    %39 = tpu.matmul %37, %38, %cst_11 {dimension_numbers = #tpu.dot_dimension_numbers<[1], [0], [0], [1], [0, 0, 1, 1], [], []>} : vector<4x4xbf16>, vector<4x256xbf16>, vector<4x256xf32> -> vector<4x256xf32>
    %40 = arith.addf %27, %39 : vector<4x256xf32>
    %c1 = arith.constant 1 : index
    %c0_12 = arith.constant 0 : index
    %c0_13 = arith.constant 0 : index
    %41 = vector.load %arg3[%c1, %c0_12, %c0_13] : memref<9x4x4xbf16, #tpu.memory_space<vmem>>, vector<1x4x4xbf16>
    %42 = vector.shape_cast %41 : vector<1x4x4xbf16> to vector<4x4xbf16>
    %43 = arith.truncf %23 : vector<4x256xf32> to vector<4x256xbf16>
    %cst_14 = arith.constant dense<0.000000e+00> : vector<4x256xf32>
    %44 = tpu.matmul %42, %43, %cst_14 {dimension_numbers = #tpu.dot_dimension_numbers<[1], [0], [0], [1], [0, 0, 1, 1], [], []>} : vector<4x4xbf16>, vector<4x256xbf16>, vector<4x256xf32> -> vector<4x256xf32>
    %45 = arith.addf %40, %44 : vector<4x256xf32>
    %c2 = arith.constant 2 : index
    %c0_15 = arith.constant 0 : index
    %c0_16 = arith.constant 0 : index
    %46 = vector.load %arg3[%c2, %c0_15, %c0_16] : memref<9x4x4xbf16, #tpu.memory_space<vmem>>, vector<1x4x4xbf16>
    %47 = vector.shape_cast %46 : vector<1x4x4xbf16> to vector<4x4xbf16>
    %48 = arith.truncf %35 : vector<4x256xf32> to vector<4x256xbf16>
    %cst_17 = arith.constant dense<0.000000e+00> : vector<4x256xf32>
    %49 = tpu.matmul %47, %48, %cst_17 {dimension_numbers = #tpu.dot_dimension_numbers<[1], [0], [0], [1], [0, 0, 1, 1], [], []>} : vector<4x4xbf16>, vector<4x256xbf16>, vector<4x256xf32> -> vector<4x256xf32>
    %50 = arith.addf %45, %49 : vector<4x256xf32>
    %c1_i32_18 = arith.constant 1 : i32
    %51 = tpu.dynamic_rotate %1 by %c1_i32_18 dim 1 : vector<4x256xf32>, i32 -> vector<4x256xf32>
    %c255_i32_19 = arith.constant 255 : i32
    %52 = tpu.dynamic_rotate %1 by %c255_i32_19 dim 1 : vector<4x256xf32>, i32 -> vector<4x256xf32>
    %53 = vector.shape_cast %14 : vector<1x256xi1> to vector<1x256xi1>
    %54 = vector.broadcast %53 : vector<1x256xi1> to vector<4x256xi1>
    %55 = arith.select %54, %52, %51 : vector<4x256xi1>, vector<4x256xf32>
    %56 = vector.shape_cast %18 : vector<1x256xi1> to vector<1x256xi1>
    %57 = vector.broadcast %56 : vector<1x256xi1> to vector<4x256xi1>
    %58 = arith.select %57, %51, %52 : vector<4x256xi1>, vector<4x256xf32>
    %c3 = arith.constant 3 : index
    %c0_20 = arith.constant 0 : index
    %c0_21 = arith.constant 0 : index
    %59 = vector.load %arg3[%c3, %c0_20, %c0_21] : memref<9x4x4xbf16, #tpu.memory_space<vmem>>, vector<1x4x4xbf16>
    %60 = vector.shape_cast %59 : vector<1x4x4xbf16> to vector<4x4xbf16>
    %61 = arith.truncf %55 : vector<4x256xf32> to vector<4x256xbf16>
    %cst_22 = arith.constant dense<0.000000e+00> : vector<4x256xf32>
    %62 = tpu.matmul %60, %61, %cst_22 {dimension_numbers = #tpu.dot_dimension_numbers<[1], [0], [0], [1], [0, 0, 1, 1], [], []>} : vector<4x4xbf16>, vector<4x256xbf16>, vector<4x256xf32> -> vector<4x256xf32>
    %63 = arith.addf %50, %62 : vector<4x256xf32>
    %c4 = arith.constant 4 : index
    %c0_23 = arith.constant 0 : index
    %c0_24 = arith.constant 0 : index
    %64 = vector.load %arg3[%c4, %c0_23, %c0_24] : memref<9x4x4xbf16, #tpu.memory_space<vmem>>, vector<1x4x4xbf16>
    %65 = vector.shape_cast %64 : vector<1x4x4xbf16> to vector<4x4xbf16>
    %66 = arith.truncf %1 : vector<4x256xf32> to vector<4x256xbf16>
    %cst_25 = arith.constant dense<0.000000e+00> : vector<4x256xf32>
    %67 = tpu.matmul %65, %66, %cst_25 {dimension_numbers = #tpu.dot_dimension_numbers<[1], [0], [0], [1], [0, 0, 1, 1], [], []>} : vector<4x4xbf16>, vector<4x256xbf16>, vector<4x256xf32> -> vector<4x256xf32>
    %68 = arith.addf %63, %67 : vector<4x256xf32>
    %c5 = arith.constant 5 : index
    %c0_26 = arith.constant 0 : index
    %c0_27 = arith.constant 0 : index
    %69 = vector.load %arg3[%c5, %c0_26, %c0_27] : memref<9x4x4xbf16, #tpu.memory_space<vmem>>, vector<1x4x4xbf16>
    %70 = vector.shape_cast %69 : vector<1x4x4xbf16> to vector<4x4xbf16>
    %71 = arith.truncf %58 : vector<4x256xf32> to vector<4x256xbf16>
    %cst_28 = arith.constant dense<0.000000e+00> : vector<4x256xf32>
    %72 = tpu.matmul %70, %71, %cst_28 {dimension_numbers = #tpu.dot_dimension_numbers<[1], [0], [0], [1], [0, 0, 1, 1], [], []>} : vector<4x4xbf16>, vector<4x256xbf16>, vector<4x256xf32> -> vector<4x256xf32>
    %73 = arith.addf %68, %72 : vector<4x256xf32>
    %c1_i32_29 = arith.constant 1 : i32
    %74 = tpu.dynamic_rotate %26 by %c1_i32_29 dim 1 : vector<4x256xf32>, i32 -> vector<4x256xf32>
    %c255_i32_30 = arith.constant 255 : i32
    %75 = tpu.dynamic_rotate %26 by %c255_i32_30 dim 1 : vector<4x256xf32>, i32 -> vector<4x256xf32>
    %76 = vector.shape_cast %14 : vector<1x256xi1> to vector<1x256xi1>
    %77 = vector.broadcast %76 : vector<1x256xi1> to vector<4x256xi1>
    %78 = arith.select %77, %75, %74 : vector<4x256xi1>, vector<4x256xf32>
    %79 = vector.shape_cast %18 : vector<1x256xi1> to vector<1x256xi1>
    %80 = vector.broadcast %79 : vector<1x256xi1> to vector<4x256xi1>
    %81 = arith.select %80, %74, %75 : vector<4x256xi1>, vector<4x256xf32>
    %c6 = arith.constant 6 : index
    %c0_31 = arith.constant 0 : index
    %c0_32 = arith.constant 0 : index
    %82 = vector.load %arg3[%c6, %c0_31, %c0_32] : memref<9x4x4xbf16, #tpu.memory_space<vmem>>, vector<1x4x4xbf16>
    %83 = vector.shape_cast %82 : vector<1x4x4xbf16> to vector<4x4xbf16>
    %84 = arith.truncf %78 : vector<4x256xf32> to vector<4x256xbf16>
    %cst_33 = arith.constant dense<0.000000e+00> : vector<4x256xf32>
    %85 = tpu.matmul %83, %84, %cst_33 {dimension_numbers = #tpu.dot_dimension_numbers<[1], [0], [0], [1], [0, 0, 1, 1], [], []>} : vector<4x4xbf16>, vector<4x256xbf16>, vector<4x256xf32> -> vector<4x256xf32>
    %86 = arith.addf %73, %85 : vector<4x256xf32>
    %c7 = arith.constant 7 : index
    %c0_34 = arith.constant 0 : index
    %c0_35 = arith.constant 0 : index
    %87 = vector.load %arg3[%c7, %c0_34, %c0_35] : memref<9x4x4xbf16, #tpu.memory_space<vmem>>, vector<1x4x4xbf16>
    %88 = vector.shape_cast %87 : vector<1x4x4xbf16> to vector<4x4xbf16>
    %89 = arith.truncf %26 : vector<4x256xf32> to vector<4x256xbf16>
    %cst_36 = arith.constant dense<0.000000e+00> : vector<4x256xf32>
    %90 = tpu.matmul %88, %89, %cst_36 {dimension_numbers = #tpu.dot_dimension_numbers<[1], [0], [0], [1], [0, 0, 1, 1], [], []>} : vector<4x4xbf16>, vector<4x256xbf16>, vector<4x256xf32> -> vector<4x256xf32>
    %91 = arith.addf %86, %90 : vector<4x256xf32>
    %c8 = arith.constant 8 : index
    %c0_37 = arith.constant 0 : index
    %c0_38 = arith.constant 0 : index
    %92 = vector.load %arg3[%c8, %c0_37, %c0_38] : memref<9x4x4xbf16, #tpu.memory_space<vmem>>, vector<1x4x4xbf16>
    %93 = vector.shape_cast %92 : vector<1x4x4xbf16> to vector<4x4xbf16>
    %94 = arith.truncf %81 : vector<4x256xf32> to vector<4x256xbf16>
    %cst_39 = arith.constant dense<0.000000e+00> : vector<4x256xf32>
    %95 = tpu.matmul %93, %94, %cst_39 {dimension_numbers = #tpu.dot_dimension_numbers<[1], [0], [0], [1], [0, 0, 1, 1], [], []>} : vector<4x4xbf16>, vector<4x256xbf16>, vector<4x256xf32> -> vector<4x256xf32>
    %96 = arith.addf %91, %95 : vector<4x256xf32>
    %cst_40 = arith.constant dense<0.000000e+00> : vector<4xf32>
    %97 = vector.multi_reduction <add>, %96, %cst_40 [1] : vector<4x256xf32> to vector<4xf32>
    %98 = vector.shape_cast %97 : vector<4xf32> to vector<4x1xf32>
    %cst_41 = arith.constant 2.560000e+02 : f32
    %99 = vector.broadcast %cst_41 : f32 to vector<4x1xf32>
    %100 = arith.divf %98, %99 : vector<4x1xf32>
    %101 = vector.broadcast %100 : vector<4x1xf32> to vector<4x256xf32>
    %102 = arith.subf %96, %101 : vector<4x256xf32>
    %103 = arith.mulf %102, %102 : vector<4x256xf32>
    %cst_42 = arith.constant dense<0.000000e+00> : vector<4xf32>
    %104 = vector.multi_reduction <add>, %103, %cst_42 [1] : vector<4x256xf32> to vector<4xf32>
    %105 = vector.shape_cast %104 : vector<4xf32> to vector<4x1xf32>
    %cst_43 = arith.constant 2.560000e+02 : f32
    %106 = vector.broadcast %cst_43 : f32 to vector<4x1xf32>
    %107 = arith.divf %105, %106 : vector<4x1xf32>
    %cst_44 = arith.constant 9.99999974E-6 : f32
    %108 = vector.broadcast %cst_44 : f32 to vector<4x1xf32>
    %109 = arith.addf %107, %108 : vector<4x1xf32>
    %110 = math.rsqrt %109 : vector<4x1xf32>
    %111 = vector.broadcast %110 : vector<4x1xf32> to vector<4x256xf32>
    %112 = arith.mulf %102, %111 : vector<4x256xf32>
    %cst_45 = arith.constant 0.000000e+00 : f32
    %113 = vector.broadcast %cst_45 : f32 to vector<4x256xf32>
    %114 = arith.maximumf %112, %113 : vector<4x256xf32>
    %c16_i32_46 = arith.constant 16 : i32
    %115 = tpu.dynamic_rotate %114 by %c16_i32_46 dim 1 : vector<4x256xf32>, i32 -> vector<4x256xf32>
    %c240_i32_47 = arith.constant 240 : i32
    %116 = tpu.dynamic_rotate %114 by %c240_i32_47 dim 1 : vector<4x256xf32>, i32 -> vector<4x256xf32>
    %117 = vector.shape_cast %6 : vector<1x256xi1> to vector<1x256xi1>
    %118 = vector.broadcast %117 : vector<1x256xi1> to vector<4x256xi1>
    %119 = arith.select %118, %116, %115 : vector<4x256xi1>, vector<4x256xf32>
    %120 = vector.shape_cast %10 : vector<1x256xi1> to vector<1x256xi1>
    %121 = vector.broadcast %120 : vector<1x256xi1> to vector<4x256xi1>
    %122 = arith.select %121, %115, %116 : vector<4x256xi1>, vector<4x256xf32>
    %cst_48 = arith.constant 0.000000e+00 : f32
    %123 = vector.broadcast %cst_48 : f32 to vector<4x256xf32>
    %c1_i32_49 = arith.constant 1 : i32
    %124 = tpu.dynamic_rotate %119 by %c1_i32_49 dim 1 : vector<4x256xf32>, i32 -> vector<4x256xf32>
    %c255_i32_50 = arith.constant 255 : i32
    %125 = tpu.dynamic_rotate %119 by %c255_i32_50 dim 1 : vector<4x256xf32>, i32 -> vector<4x256xf32>
    %126 = vector.shape_cast %14 : vector<1x256xi1> to vector<1x256xi1>
    %127 = vector.broadcast %126 : vector<1x256xi1> to vector<4x256xi1>
    %128 = arith.select %127, %125, %124 : vector<4x256xi1>, vector<4x256xf32>
    %129 = vector.shape_cast %18 : vector<1x256xi1> to vector<1x256xi1>
    %130 = vector.broadcast %129 : vector<1x256xi1> to vector<4x256xi1>
    %131 = arith.select %130, %124, %125 : vector<4x256xi1>, vector<4x256xf32>
    %c0_51 = arith.constant 0 : index
    %c0_52 = arith.constant 0 : index
    %c0_53 = arith.constant 0 : index
    %132 = vector.load %arg4[%c0_51, %c0_52, %c0_53] : memref<9x4x4xbf16, #tpu.memory_space<vmem>>, vector<1x4x4xbf16>
    %133 = vector.shape_cast %132 : vector<1x4x4xbf16> to vector<4x4xbf16>
    %134 = arith.truncf %128 : vector<4x256xf32> to vector<4x256xbf16>
    %cst_54 = arith.constant dense<0.000000e+00> : vector<4x256xf32>
    %135 = tpu.matmul %133, %134, %cst_54 {dimension_numbers = #tpu.dot_dimension_numbers<[1], [0], [0], [1], [0, 0, 1, 1], [], []>} : vector<4x4xbf16>, vector<4x256xbf16>, vector<4x256xf32> -> vector<4x256xf32>
    %136 = arith.addf %123, %135 : vector<4x256xf32>
    %c1_55 = arith.constant 1 : index
    %c0_56 = arith.constant 0 : index
    %c0_57 = arith.constant 0 : index
    %137 = vector.load %arg4[%c1_55, %c0_56, %c0_57] : memref<9x4x4xbf16, #tpu.memory_space<vmem>>, vector<1x4x4xbf16>
    %138 = vector.shape_cast %137 : vector<1x4x4xbf16> to vector<4x4xbf16>
    %139 = arith.truncf %119 : vector<4x256xf32> to vector<4x256xbf16>
    %cst_58 = arith.constant dense<0.000000e+00> : vector<4x256xf32>
    %140 = tpu.matmul %138, %139, %cst_58 {dimension_numbers = #tpu.dot_dimension_numbers<[1], [0], [0], [1], [0, 0, 1, 1], [], []>} : vector<4x4xbf16>, vector<4x256xbf16>, vector<4x256xf32> -> vector<4x256xf32>
    %141 = arith.addf %136, %140 : vector<4x256xf32>
    %c2_59 = arith.constant 2 : index
    %c0_60 = arith.constant 0 : index
    %c0_61 = arith.constant 0 : index
    %142 = vector.load %arg4[%c2_59, %c0_60, %c0_61] : memref<9x4x4xbf16, #tpu.memory_space<vmem>>, vector<1x4x4xbf16>
    %143 = vector.shape_cast %142 : vector<1x4x4xbf16> to vector<4x4xbf16>
    %144 = arith.truncf %131 : vector<4x256xf32> to vector<4x256xbf16>
    %cst_62 = arith.constant dense<0.000000e+00> : vector<4x256xf32>
    %145 = tpu.matmul %143, %144, %cst_62 {dimension_numbers = #tpu.dot_dimension_numbers<[1], [0], [0], [1], [0, 0, 1, 1], [], []>} : vector<4x4xbf16>, vector<4x256xbf16>, vector<4x256xf32> -> vector<4x256xf32>
    %146 = arith.addf %141, %145 : vector<4x256xf32>
    %c1_i32_63 = arith.constant 1 : i32
    %147 = tpu.dynamic_rotate %114 by %c1_i32_63 dim 1 : vector<4x256xf32>, i32 -> vector<4x256xf32>
    %c255_i32_64 = arith.constant 255 : i32
    %148 = tpu.dynamic_rotate %114 by %c255_i32_64 dim 1 : vector<4x256xf32>, i32 -> vector<4x256xf32>
    %149 = vector.shape_cast %14 : vector<1x256xi1> to vector<1x256xi1>
    %150 = vector.broadcast %149 : vector<1x256xi1> to vector<4x256xi1>
    %151 = arith.select %150, %148, %147 : vector<4x256xi1>, vector<4x256xf32>
    %152 = vector.shape_cast %18 : vector<1x256xi1> to vector<1x256xi1>
    %153 = vector.broadcast %152 : vector<1x256xi1> to vector<4x256xi1>
    %154 = arith.select %153, %147, %148 : vector<4x256xi1>, vector<4x256xf32>
    %c3_65 = arith.constant 3 : index
    %c0_66 = arith.constant 0 : index
    %c0_67 = arith.constant 0 : index
    %155 = vector.load %arg4[%c3_65, %c0_66, %c0_67] : memref<9x4x4xbf16, #tpu.memory_space<vmem>>, vector<1x4x4xbf16>
    %156 = vector.shape_cast %155 : vector<1x4x4xbf16> to vector<4x4xbf16>
    %157 = arith.truncf %151 : vector<4x256xf32> to vector<4x256xbf16>
    %cst_68 = arith.constant dense<0.000000e+00> : vector<4x256xf32>
    %158 = tpu.matmul %156, %157, %cst_68 {dimension_numbers = #tpu.dot_dimension_numbers<[1], [0], [0], [1], [0, 0, 1, 1], [], []>} : vector<4x4xbf16>, vector<4x256xbf16>, vector<4x256xf32> -> vector<4x256xf32>
    %159 = arith.addf %146, %158 : vector<4x256xf32>
    %c4_69 = arith.constant 4 : index
    %c0_70 = arith.constant 0 : index
    %c0_71 = arith.constant 0 : index
    %160 = vector.load %arg4[%c4_69, %c0_70, %c0_71] : memref<9x4x4xbf16, #tpu.memory_space<vmem>>, vector<1x4x4xbf16>
    %161 = vector.shape_cast %160 : vector<1x4x4xbf16> to vector<4x4xbf16>
    %162 = arith.truncf %114 : vector<4x256xf32> to vector<4x256xbf16>
    %cst_72 = arith.constant dense<0.000000e+00> : vector<4x256xf32>
    %163 = tpu.matmul %161, %162, %cst_72 {dimension_numbers = #tpu.dot_dimension_numbers<[1], [0], [0], [1], [0, 0, 1, 1], [], []>} : vector<4x4xbf16>, vector<4x256xbf16>, vector<4x256xf32> -> vector<4x256xf32>
    %164 = arith.addf %159, %163 : vector<4x256xf32>
    %c5_73 = arith.constant 5 : index
    %c0_74 = arith.constant 0 : index
    %c0_75 = arith.constant 0 : index
    %165 = vector.load %arg4[%c5_73, %c0_74, %c0_75] : memref<9x4x4xbf16, #tpu.memory_space<vmem>>, vector<1x4x4xbf16>
    %166 = vector.shape_cast %165 : vector<1x4x4xbf16> to vector<4x4xbf16>
    %167 = arith.truncf %154 : vector<4x256xf32> to vector<4x256xbf16>
    %cst_76 = arith.constant dense<0.000000e+00> : vector<4x256xf32>
    %168 = tpu.matmul %166, %167, %cst_76 {dimension_numbers = #tpu.dot_dimension_numbers<[1], [0], [0], [1], [0, 0, 1, 1], [], []>} : vector<4x4xbf16>, vector<4x256xbf16>, vector<4x256xf32> -> vector<4x256xf32>
    %169 = arith.addf %164, %168 : vector<4x256xf32>
    %c1_i32_77 = arith.constant 1 : i32
    %170 = tpu.dynamic_rotate %122 by %c1_i32_77 dim 1 : vector<4x256xf32>, i32 -> vector<4x256xf32>
    %c255_i32_78 = arith.constant 255 : i32
    %171 = tpu.dynamic_rotate %122 by %c255_i32_78 dim 1 : vector<4x256xf32>, i32 -> vector<4x256xf32>
    %172 = vector.shape_cast %14 : vector<1x256xi1> to vector<1x256xi1>
    %173 = vector.broadcast %172 : vector<1x256xi1> to vector<4x256xi1>
    %174 = arith.select %173, %171, %170 : vector<4x256xi1>, vector<4x256xf32>
    %175 = vector.shape_cast %18 : vector<1x256xi1> to vector<1x256xi1>
    %176 = vector.broadcast %175 : vector<1x256xi1> to vector<4x256xi1>
    %177 = arith.select %176, %170, %171 : vector<4x256xi1>, vector<4x256xf32>
    %c6_79 = arith.constant 6 : index
    %c0_80 = arith.constant 0 : index
    %c0_81 = arith.constant 0 : index
    %178 = vector.load %arg4[%c6_79, %c0_80, %c0_81] : memref<9x4x4xbf16, #tpu.memory_space<vmem>>, vector<1x4x4xbf16>
    %179 = vector.shape_cast %178 : vector<1x4x4xbf16> to vector<4x4xbf16>
    %180 = arith.truncf %174 : vector<4x256xf32> to vector<4x256xbf16>
    %cst_82 = arith.constant dense<0.000000e+00> : vector<4x256xf32>
    %181 = tpu.matmul %179, %180, %cst_82 {dimension_numbers = #tpu.dot_dimension_numbers<[1], [0], [0], [1], [0, 0, 1, 1], [], []>} : vector<4x4xbf16>, vector<4x256xbf16>, vector<4x256xf32> -> vector<4x256xf32>
    %182 = arith.addf %169, %181 : vector<4x256xf32>
    %c7_83 = arith.constant 7 : index
    %c0_84 = arith.constant 0 : index
    %c0_85 = arith.constant 0 : index
    %183 = vector.load %arg4[%c7_83, %c0_84, %c0_85] : memref<9x4x4xbf16, #tpu.memory_space<vmem>>, vector<1x4x4xbf16>
    %184 = vector.shape_cast %183 : vector<1x4x4xbf16> to vector<4x4xbf16>
    %185 = arith.truncf %122 : vector<4x256xf32> to vector<4x256xbf16>
    %cst_86 = arith.constant dense<0.000000e+00> : vector<4x256xf32>
    %186 = tpu.matmul %184, %185, %cst_86 {dimension_numbers = #tpu.dot_dimension_numbers<[1], [0], [0], [1], [0, 0, 1, 1], [], []>} : vector<4x4xbf16>, vector<4x256xbf16>, vector<4x256xf32> -> vector<4x256xf32>
    %187 = arith.addf %182, %186 : vector<4x256xf32>
    %c8_87 = arith.constant 8 : index
    %c0_88 = arith.constant 0 : index
    %c0_89 = arith.constant 0 : index
    %188 = vector.load %arg4[%c8_87, %c0_88, %c0_89] : memref<9x4x4xbf16, #tpu.memory_space<vmem>>, vector<1x4x4xbf16>
    %189 = vector.shape_cast %188 : vector<1x4x4xbf16> to vector<4x4xbf16>
    %190 = arith.truncf %177 : vector<4x256xf32> to vector<4x256xbf16>
    %cst_90 = arith.constant dense<0.000000e+00> : vector<4x256xf32>
    %191 = tpu.matmul %189, %190, %cst_90 {dimension_numbers = #tpu.dot_dimension_numbers<[1], [0], [0], [1], [0, 0, 1, 1], [], []>} : vector<4x4xbf16>, vector<4x256xbf16>, vector<4x256xf32> -> vector<4x256xf32>
    %192 = arith.addf %187, %191 : vector<4x256xf32>
    %cst_91 = arith.constant dense<0.000000e+00> : vector<4xf32>
    %193 = vector.multi_reduction <add>, %192, %cst_91 [1] : vector<4x256xf32> to vector<4xf32>
    %194 = vector.shape_cast %193 : vector<4xf32> to vector<4x1xf32>
    %cst_92 = arith.constant 2.560000e+02 : f32
    %195 = vector.broadcast %cst_92 : f32 to vector<4x1xf32>
    %196 = arith.divf %194, %195 : vector<4x1xf32>
    %197 = vector.broadcast %196 : vector<4x1xf32> to vector<4x256xf32>
    %198 = arith.subf %192, %197 : vector<4x256xf32>
    %199 = arith.mulf %198, %198 : vector<4x256xf32>
    %cst_93 = arith.constant dense<0.000000e+00> : vector<4xf32>
    %200 = vector.multi_reduction <add>, %199, %cst_93 [1] : vector<4x256xf32> to vector<4xf32>
    %201 = vector.shape_cast %200 : vector<4xf32> to vector<4x1xf32>
    %cst_94 = arith.constant 2.560000e+02 : f32
    %202 = vector.broadcast %cst_94 : f32 to vector<4x1xf32>
    %203 = arith.divf %201, %202 : vector<4x1xf32>
    %cst_95 = arith.constant 9.99999974E-6 : f32
    %204 = vector.broadcast %cst_95 : f32 to vector<4x1xf32>
    %205 = arith.addf %203, %204 : vector<4x1xf32>
    %206 = math.rsqrt %205 : vector<4x1xf32>
    %207 = vector.broadcast %206 : vector<4x1xf32> to vector<4x256xf32>
    %208 = arith.mulf %198, %207 : vector<4x256xf32>
    %209 = arith.addf %1, %208 : vector<4x256xf32>
    %c0_96 = arith.constant 0 : index
    %c0_97 = arith.constant 0 : index
    %c0_98 = arith.constant 0 : index
    %210 = vector.load %arg5[%c0_96, %c0_97, %c0_98] : memref<1x4x256xf32, #tpu.memory_space<vmem>>, vector<1x4x256xf32>
    %211 = vector.shape_cast %210 : vector<1x4x256xf32> to vector<4x256xf32>
    %212 = vector.shape_cast %209 : vector<4x256xf32> to vector<1x4x256xf32>
    tpu.vector_store %arg5[%c0_96, %c0_97, %c0_98], %212 {strides = array<i32>} : memref<1x4x256xf32, #tpu.memory_space<vmem>>, vector<1x4x256xf32>,
    return
  }
  func.func @transform_0(%arg0: i32) -> (i32, i32, i32) {
    %c0_i32 = arith.constant 0 : i32
    %c0_i32_0 = arith.constant 0 : i32
    %c0_i32_1 = arith.constant 0 : i32
    return %arg0, %c0_i32, %c0_i32_0 : i32, i32, i32
  }
  func.func @transform_1(%arg0: i32) -> (i32, i32) {
    %c0_i32 = arith.constant 0 : i32
    %c0_i32_0 = arith.constant 0 : i32
    %c0_i32_1 = arith.constant 0 : i32
    return %c0_i32, %c0_i32_0 : i32, i32
  }
  func.func @transform_2(%arg0: i32) -> (i32, i32, i32) {
    %c0_i32 = arith.constant 0 : i32
    %c0_i32_0 = arith.constant 0 : i32
    %c0_i32_1 = arith.constant 0 : i32
    %c0_i32_2 = arith.constant 0 : i32
    return %c0_i32, %c0_i32_0, %c0_i32_1 : i32, i32, i32
  }
  func.func @transform_3(%arg0: i32) -> (i32, i32, i32) {
    %c0_i32 = arith.constant 0 : i32
    %c0_i32_0 = arith.constant 0 : i32
    %c0_i32_1 = arith.constant 0 : i32
    %c0_i32_2 = arith.constant 0 : i32
    return %c0_i32, %c0_i32_0, %c0_i32_1 : i32, i32, i32
  }
  func.func @transform_4(%arg0: i32) -> (i32, i32, i32) {
    %c0_i32 = arith.constant 0 : i32
    %c0_i32_0 = arith.constant 0 : i32
    %c0_i32_1 = arith.constant 0 : i32
    return %arg0, %c0_i32, %c0_i32_0 : i32, i32, i32
  }
}

</mosaic_0001>

<llo_original>
// kernel: resblock.1
$region0: #{resblock.1}
  #allocation0 [shape = 'u32[]', space=smem, size = 0x4, offset = 0x4, fixed_abs, tag = 'smem constant byte address 0x4 - core index']
  #allocation1 [shape = 'u32[144,128]{1,0:T(1,128)}', space=vmem, size = 0x12000, scoped, tag = 'internal scratch']
  %s0 = inlined_call_operand.vmem [shape: f32[2,4,256], index: 0, kind: input, shape index: {}]
  %s1 = inlined_call_operand.vmem [shape: s32[1,256], index: 1, kind: input, shape index: {}]
  %s2 = inlined_call_operand.vmem [shape: bf16[9,4,4], index: 2, kind: input, shape index: {}]
  %s3 = inlined_call_operand.vmem [shape: bf16[9,4,4], index: 3, kind: input, shape index: {}]
  %s4 = inlined_call_operand.vmem [shape: f32[2,4,256], index: 4, kind: output, shape index: {}]
  %s5 = sld [smem:[#allocation0]]
  $region49: #{resblock.1} parent=0
    _
  %s7 = ssub.s32 1, %s5
  %s8 = scalar_select 0, %s7, %s5
  loop: start=0, step=1, limit=4
  $region2: #{resblock.1} parent=0 // loop_pre_header
    _
  $region3: #{resblock.1} parent=0 // loop_header
    %s10 = sphi 0, %s14
    %p11 = scmp.ge.s32.totalorder %s10, 4
    %s20 = sphi 0, %s22
    %s23 = sphi 0, %s20
    %s24 = sphi 0, %s23
    %s40 = sphi 0, %s24
    %s44 = sphi 0, %s44
    %s46 = sphi 0, %s44
    %s47 = sphi 0, %s46
    %s61 = sphi 0, %s47
    %s65 = sphi 0, %s65
    %s67 = sphi 0, %s65
    %s68 = sphi 0, %s67
    %s82 = sphi 0, %s68
    %s86 = sphi 0, %s86
    %s88 = sphi 0, %s86
    %s89 = sphi 0, %s88
    %s103 = sphi 0, %s89
    %s109 = sphi 0, %s111
    %s112 = sphi 0, %s109
    %s113 = sphi 0, %s112
    %s129 = sphi 0, %s113
  $region4: #{resblock.1} parent=0 // loop_header_branch
    %13 = sbr.rel (%p11) target = $region8
  $region5: #{resblock.1} parent=0 // loop_body
    %s15 = ssub.s32 %s10, 1
    %s16 = ssub.s32 %s10, 2
    %s17 = sadd.s32 %s10, 1
    %s18 = ssub.s32 %s10, %s17
    %p19 = scmp.eq.s32.totalorder %s18, 0
    %s21 = sadd.s32 %s20, 1
    %s22 = scalar_select %p19, %s20, %s21
    %p25 = pneg %p19
    %p26 = scmp.eq.s32.totalorder %s10, 1
    %p27 = por %p25, %p26
    %p28 = scmp.ne.s32.totalorder %s20, %s23
    %p29 = scmp.eq.s32.totalorder %s10, 0
    %p30 = por %p28, %p29
    %p31 = scmp.ne.s32.totalorder %s20, %s23
    %p32 = scmp.eq.s32.totalorder %s15, 1
    %p33 = por %p31, %p32
    %p34 = scmp.ne.s32.totalorder %s23, %s24
    %p35 = scmp.eq.s32.totalorder %s15, 0
    %p36 = por %p34, %p35
    %p37 = scmp.ne.s32.totalorder %s23, %s24
    %p38 = scmp.eq.s32.totalorder %s16, 1
    %p39 = por %p37, %p38
    %p41 = scmp.ne.s32.totalorder %s24, %s40
    %p42 = scmp.eq.s32.totalorder %s16, 0
    %p43 = por %p41, %p42
    %s45 = sadd.s32 %s44, 1
    %p48 = scmp.eq.s32.totalorder %s10, 1
    %p49 = scmp.ne.s32.totalorder %s44, %s46
    %p50 = scmp.eq.s32.totalorder %s10, 0
    %p51 = por %p49, %p50
    %p52 = scmp.ne.s32.totalorder %s44, %s46
    %p53 = scmp.eq.s32.totalorder %s15, 1
    %p54 = por %p52, %p53
    %p55 = scmp.ne.s32.totalorder %s46, %s47
    %p56 = scmp.eq.s32.totalorder %s15, 0
    %p57 = por %p55, %p56
    %p58 = scmp.ne.s32.totalorder %s46, %s47
    %p59 = scmp.eq.s32.totalorder %s16, 1
    %p60 = por %p58, %p59
    %p62 = scmp.ne.s32.totalorder %s47, %s61
    %p63 = scmp.eq.s32.totalorder %s16, 0
    %p64 = por %p62, %p63
    %s66 = sadd.s32 %s65, 1
    %p69 = scmp.eq.s32.totalorder %s10, 1
    %p70 = scmp.ne.s32.totalorder %s65, %s67
    %p71 = scmp.eq.s32.totalorder %s10, 0
    %p72 = por %p70, %p71
    %p73 = scmp.ne.s32.totalorder %s65, %s67
    %p74 = scmp.eq.s32.totalorder %s15, 1
    %p75 = por %p73, %p74
    %p76 = scmp.ne.s32.totalorder %s67, %s68
    %p77 = scmp.eq.s32.totalorder %s15, 0
    %p78 = por %p76, %p77
    %p79 = scmp.ne.s32.totalorder %s67, %s68
    %p80 = scmp.eq.s32.totalorder %s16, 1
    %p81 = por %p79, %p80
    %p83 = scmp.ne.s32.totalorder %s68, %s82
    %p84 = scmp.eq.s32.totalorder %s16, 0
    %p85 = por %p83, %p84
    %s87 = sadd.s32 %s86, 1
    %p90 = scmp.eq.s32.totalorder %s10, 1
    %p91 = scmp.ne.s32.totalorder %s86, %s88
    %p92 = scmp.eq.s32.totalorder %s10, 0
    %p93 = por %p91, %p92
    %p94 = scmp.ne.s32.totalorder %s86, %s88
    %p95 = scmp.eq.s32.totalorder %s15, 1
    %p96 = por %p94, %p95
    %p97 = scmp.ne.s32.totalorder %s88, %s89
    %p98 = scmp.eq.s32.totalorder %s15, 0
    %p99 = por %p97, %p98
    %p100 = scmp.ne.s32.totalorder %s88, %s89
    %p101 = scmp.eq.s32.totalorder %s16, 1
    %p102 = por %p100, %p101
    %p104 = scmp.ne.s32.totalorder %s89, %s103
    %p105 = scmp.eq.s32.totalorder %s16, 0
    %p106 = por %p104, %p105
    %s107 = ssub.s32 %s10, %s17
    %p108 = scmp.eq.s32.totalorder %s107, 0
    %s110 = sadd.s32 %s109, 1
    %s111 = scalar_select %p108, %s109, %s110
    %p114 = pneg %p108
    %p115 = scmp.eq.s32.totalorder %s10, 1
    %p116 = por %p114, %p115
    %p117 = scmp.ne.s32.totalorder %s109, %s112
    %p118 = scmp.eq.s32.totalorder %s10, 0
    %p119 = por %p117, %p118
    %p120 = scmp.ne.s32.totalorder %s109, %s112
    %p121 = scmp.eq.s32.totalorder %s15, 1
    %p122 = por %p120, %p121
    %p123 = scmp.ne.s32.totalorder %s112, %s113
    %p124 = scmp.eq.s32.totalorder %s15, 0
    %p125 = por %p123, %p124
    %p126 = scmp.ne.s32.totalorder %s112, %s113
    %p127 = scmp.eq.s32.totalorder %s16, 1
    %p128 = por %p126, %p127
    %p130 = scmp.ne.s32.totalorder %s113, %s129
    %p131 = scmp.eq.s32.totalorder %s16, 0
    %p132 = por %p130, %p131
    %p133 = scmp.le.s32.totalorder 1, %s10
    %p134 = scmp.lt.s32.totalorder %s10, 3
    %p135 = pnand %p133, %p134
    %p136 = pneg %p135
    // Predicated region
    $region9: #{resblock.1} parent=5 // pred_check
      _
    $region10: #{resblock.1} parent=5 // pred_check_branch
      %138 = sbr.rel (%p135) target = $region12
    $region11: #{resblock.1} parent=5 // pred_region
      %s139 = ssub.s32 %s10, 1
      // Predicated region
      $region13: #{resblock.1} parent=11 // pred_check
        %p140 = pneg %p57
      $region14: #{resblock.1} parent=11 // pred_check_branch
        %142 = sbr.rel (%p140) target = $region16
      $region15: #{resblock.1} parent=11 // pred_region
        _
      $region16: #{resblock.1} parent=11 // pred_fallthru
        _
      // Predicated region
      $region17: #{resblock.1} parent=11 // pred_check
        %p143 = pneg %p78
      $region18: #{resblock.1} parent=11 // pred_check_branch
        %145 = sbr.rel (%p143) target = $region20
      $region19: #{resblock.1} parent=11 // pred_region
        _
      $region20: #{resblock.1} parent=11 // pred_fallthru
        _
      // Predicated region
      $region21: #{resblock.1} parent=11 // pred_check
        %p146 = pneg %p99
      $region22: #{resblock.1} parent=11 // pred_check_branch
        %148 = sbr.rel (%p146) target = $region24
      $region23: #{resblock.1} parent=11 // pred_region
        _
      $region24: #{resblock.1} parent=11 // pred_fallthru
        _
    $region12: #{resblock.1} parent=5 // pred_fallthru
      _
    %p149 = scmp.lt.s32.totalorder %s10, 2
    // Predicated region
    $region25: #{resblock.1} parent=5 // pred_check
      %p150 = pneg %p149
    $region26: #{resblock.1} parent=5 // pred_check_branch
      %152 = sbr.rel (%p150) target = $region28
    $region27: #{resblock.1} parent=5 // pred_region
      // Predicated region
      $region29: #{resblock.1} parent=27 // pred_check
        %p153 = pneg %p30
      $region30: #{resblock.1} parent=27 // pred_check_branch
        %155 = sbr.rel (%p153) target = $region32
      $region31: #{resblock.1} parent=27 // pred_region
        %p156 = scmp.lt.s32.totalorder %s10, 1
        %s157 = scalar_select %p156, %s10, 1
        %s158 = smul.addr %s157, 2
        %s159 = smul.addr %s158, 4
        %s160 = scalar_lea.vmem %s0, %s159
      $region32: #{resblock.1} parent=27 // pred_fallthru
        _
    $region28: #{resblock.1} parent=5 // pred_fallthru
      _
    %p161 = scmp.le.s32.totalorder 1, %s10
    %p162 = scmp.lt.s32.totalorder %s10, 3
    %p163 = pnand %p161, %p162
    %p164 = pneg %p163
    // Predicated region
    $region33: #{resblock.1} parent=5 // pred_check
      _
    $region34: #{resblock.1} parent=5 // pred_check_branch
      %166 = sbr.rel (%p163) target = $region36
    $region35: #{resblock.1} parent=5 // pred_region
      %s167 = ssub.s32 %s10, 1
      %p168 = scmp.lt.s32.totalorder %s15, 1
      %s169 = scalar_select %p168, %s15, 1
      %s170 = smul.addr %s169, 2
      %s171 = smul.addr %s170, 4
      %s172 = scalar_lea.vmem %s0, %s171
      %p173 = pneg %p36
      %p174 = pneg %p33
      %p175 = pneg %p57
      %p176 = pneg %p54
      %p177 = pneg %p78
      %p178 = pneg %p75
      %p179 = pneg %p99
      %p180 = pneg %p96
      %p181 = pneg %p125
      %p182 = pneg %p122
      %p183 = scmp.lt.s32.totalorder %s15, 1
      %s184 = scalar_select %p183, %s15, 1
      %s185 = smul.addr %s184, 2
      %s186 = smul.addr %s185, 4
      %s187 = scalar_lea.vmem %s4, %s186
      %p188 = scmp.lt.s32.totalorder %s15, 1
      %s189 = scalar_select %p188, %s15, 1
      %s190 = smul.addr %s189, 2
      %s191 = smul.addr %s190, 4
      %s192 = scalar_lea.vmem %s0, %s191
      %p193 = scmp.lt.s32.totalorder %s15, 1
      %s194 = scalar_select %p193, %s15, 1
      %s195 = smul.addr %s194, 2
      %s196 = smul.addr %s195, 4
      %s197 = scalar_lea.vmem %s4, %s196
      %v199 = vld [vmem:[%s192] sm:$0xff]
      %v200 = vld [vmem:[%s1] sm:$0x3]
      %v201 = vand.u32 %v200, 1
      %vm202 = vcmp.ne.s32.totalorder %v201, 0
      %v203 = vand.u32 %v200, 2
      %vm204 = vcmp.ne.s32.totalorder %v203, 0
      %v205 = vand.u32 %v200, 4
      %vm206 = vcmp.ne.s32.totalorder %v205, 0
      %v207 = vand.u32 %v200, 8
      %vm208 = vcmp.ne.s32.totalorder %v207, 0
      %v210 = vcombine.high %v199, %v199
      %212 = vrot.lane.b32.xlu0 %v199, 16
      %v213 = vpop.permute.xlu0 %212
      %214 = vrot.lane.b32.xlu0 %v210, 16
      %v215 = vpop.permute.xlu0 %214
      %v216 = vlaneseq
      %v217 = vand.u32 %v216, 127
      %vm218 = vcmp.lt.s32.totalorder %v217, 16
      %v219 = vsel %vm218, %v213, %v215
      %v220 = vsel %vm218, %v215, %v213
      %221 = vrot.lane.b32.xlu0 %v199, 112
      %v222 = vpop.permute.xlu0 %221
      %223 = vrot.lane.b32.xlu0 %v210, 112
      %v224 = vpop.permute.xlu0 %223
      %vm225 = vcmp.lt.s32.totalorder %v217, 112
      %v226 = vsel %vm225, %v222, %v224
      %v227 = vsel %vm225, %v224, %v222
      %v228 = vsel %vm202, 1, 0
      %v229 = vlaneseq
      %v230 = vshrl.u32 %v229, 7
      %v231 = vsub.s32 0, %v230
      %v232 = vrot.slane %v228, %v231
      %v233 = vlaneseq
      %v234 = vshrl.u32 %v233, 7
      %v235 = vsub.s32 1, %v234
      %v236 = vrot.slane %v228, %v235
      %vm237 = vcmp.eq.s32.totalorder %v232, 1
      %vm238 = vcmp.eq.s32.totalorder %v236, 1
      %v239 = vsel %vm237, %v226, %v220
      %v240 = vsel %vm238, %v227, %v219
      %v241 = vsel %vm204, 1, 0
      %v242 = vlaneseq
      %v243 = vshrl.u32 %v242, 7
      %v244 = vsub.s32 0, %v243
      %v245 = vrot.slane %v241, %v244
      %v246 = vlaneseq
      %v247 = vshrl.u32 %v246, 7
      %v248 = vsub.s32 1, %v247
      %v249 = vrot.slane %v241, %v248
      %vm250 = vcmp.eq.s32.totalorder %v245, 1
      %vm251 = vcmp.eq.s32.totalorder %v249, 1
      %v252 = vsel %vm250, %v220, %v226
      %v253 = vsel %vm251, %v219, %v227
      %254 = vrot.lane.b32.xlu0 %v239, 1
      %v255 = vpop.permute.xlu0 %254
      %256 = vrot.lane.b32.xlu0 %v240, 1
      %v257 = vpop.permute.xlu0 %256
      %vm258 = vcmp.lt.s32.totalorder %v217, 1
      %v259 = vsel %vm258, %v255, %v257
      %v260 = vsel %vm258, %v257, %v255
      %261 = vrot.lane.b32.xlu0 %v239, 127
      %v262 = vpop.permute.xlu0 %261
      %263 = vrot.lane.b32.xlu0 %v240, 127
      %v264 = vpop.permute.xlu0 %263
      %vm265 = vcmp.lt.s32.totalorder %v217, 127
      %v266 = vsel %vm265, %v262, %v264
      %v267 = vsel %vm265, %v264, %v262
      %v268 = vsel %vm206, 1, 0
      %v269 = vlaneseq
      %v270 = vshrl.u32 %v269, 7
      %v271 = vsub.s32 0, %v270
      %v272 = vrot.slane %v268, %v271
      %v273 = vlaneseq
      %v274 = vshrl.u32 %v273, 7
      %v275 = vsub.s32 1, %v274
      %v276 = vrot.slane %v268, %v275
      %vm277 = vcmp.eq.s32.totalorder %v272, 1
      %vm278 = vcmp.eq.s32.totalorder %v276, 1
      %v279 = vsel %vm277, %v266, %v260
      %v280 = vsel %vm278, %v267, %v259
      %v281 = vsel %vm208, 1, 0
      %v282 = vlaneseq
      %v283 = vshrl.u32 %v282, 7
      %v284 = vsub.s32 0, %v283
      %v285 = vrot.slane %v281, %v284
      %v286 = vlaneseq
      %v287 = vshrl.u32 %v286, 7
      %v288 = vsub.s32 1, %v287
      %v289 = vrot.slane %v281, %v288
      %vm290 = vcmp.eq.s32.totalorder %v285, 1
      %vm291 = vcmp.eq.s32.totalorder %v289, 1
      %v292 = vsel %vm290, %v260, %v266
      %v293 = vsel %vm291, %v259, %v267
      %v294 = vld [vmem:[%s2] sm:$0x3]
      %v295 = vpack.c.bf16 %v279, %v279
      %v296 = vpack.c.bf16 %v280, %v280
      %s297 = scalar_lea.vmem %s2, 2
      %v298 = vld [vmem:[%s297] sm:$0x3]
      %v299 = vpack.c.bf16 %v239, %v239
      %v300 = vpack.c.bf16 %v240, %v240
      %vm301 = vcmask 31744
      %v303 = vsel %vm301, %v298, 0
      %vm305 = vcmask 1041408
      %v307 = vsel %vm305, %v299, 0
      %v310 = vsel %vm305, %v300, 0
      %312 = vmatprep.subr.bf16.mxu0 %v310
      %313 = vmatpush1.bf16.msra.mxu0 %v307
      %314 = vmatprep.subr.bf16.mxu0 0
      %315 = vmatpush1.bf16.msra.mxu0 0
      %316 = vmatprep.subr.bf16.mxu0 0
      %317 = vmatpush1.bf16.msra.mxu0 0
      %318 = vmatprep.subr.bf16.mxu0 0
      %319 = vmatpush1.bf16.msra.mxu0 0
      %320 = vmatprep.subr.bf16.mxu0 0
      %321 = vmatpush1.bf16.msra.mxu0 0
      %322 = vmatprep.subr.bf16.mxu0 0
      %323 = vmatpush1.bf16.msra.mxu0 0
      %324 = vmatprep.subr.bf16.mxu0 0
      %325 = vmatpush1.bf16.msra.mxu0 0
      %326 = vmatprep.subr.bf16.mxu0 0
      %327 = vmatpush1.bf16.msra.mxu0 0
      %328 = vmatprep.subr.bf16.mxu0 0
      %329 = vmatpush1.bf16.msra.mxu0 0
      %330 = vmatprep.subr.bf16.mxu0 0
      %331 = vmatpush1.bf16.msra.mxu0 0
      %332 = vmatprep.subr.bf16.mxu0 0
      %333 = vmatpush1.bf16.msra.mxu0 0
      %334 = vmatprep.subr.bf16.mxu0 0
      %335 = vmatpush1.bf16.msra.mxu0 0
      %336 = vmatprep.subr.bf16.mxu0 0
      %337 = vmatpush1.bf16.msra.mxu0 0
      %338 = vmatprep.subr.bf16.mxu0 0
      %339 = vmatpush1.bf16.msra.mxu0 0
      %340 = vmatprep.subr.bf16.mxu0 0
      %341 = vmatpush1.bf16.msra.mxu0 0
      %342 = vmatprep.subr.bf16.mxu0 0
      %343 = vmatpush1.bf16.msra.mxu0 0
      %344 = vmatprep.mubr.bf16.mxu0 0
      %345 = vmatmul.mubr.bf16.gmra.mrb[0].mxu0 %v303
      %v346 = vpop.f32.mrb[0].mxu0
      %v347 = vadd.f32 0.0, %v346
      %v348 = vpop.f32.mrb[0].mxu0
      %v349 = vadd.f32 0.0, %v348
      %v350 = vpop.f32.mrb[0].mxu0
      %v351 = vpop.f32.mrb[0].mxu0
      %352 = vdwg.mxu0
      %v354 = vsel %vm301, %v294, 0
      %v357 = vsel %vm305, %v295, 0
      %v360 = vsel %vm305, %v296, 0
      %362 = vmatprep.subr.bf16.mxu0 %v360
      %363 = vmatpush1.bf16.msra.mxu0 %v357
      %364 = vmatprep.subr.bf16.mxu0 0
      %365 = vmatpush1.bf16.msra.mxu0 0
      %366 = vmatprep.subr.bf16.mxu0 0
      %367 = vmatpush1.bf16.msra.mxu0 0
      %368 = vmatprep.subr.bf16.mxu0 0
      %369 = vmatpush1.bf16.msra.mxu0 0
      %370 = vmatprep.subr.bf16.mxu0 0
      %371 = vmatpush1.bf16.msra.mxu0 0
      %372 = vmatprep.subr.bf16.mxu0 0
      %373 = vmatpush1.bf16.msra.mxu0 0
      %374 = vmatprep.subr.bf16.mxu0 0
      %375 = vmatpush1.bf16.msra.mxu0 0
      %376 = vmatprep.subr.bf16.mxu0 0
      %377 = vmatpush1.bf16.msra.mxu0 0
      %378 = vmatprep.subr.bf16.mxu0 0
      %379 = vmatpush1.bf16.msra.mxu0 0
      %380 = vmatprep.subr.bf16.mxu0 0
      %381 = vmatpush1.bf16.msra.mxu0 0
      %382 = vmatprep.subr.bf16.mxu0 0
      %383 = vmatpush1.bf16.msra.mxu0 0
      %384 = vmatprep.subr.bf16.mxu0 0
      %385 = vmatpush1.bf16.msra.mxu0 0
      %386 = vmatprep.subr.bf16.mxu0 0
      %387 = vmatpush1.bf16.msra.mxu0 0
      %388 = vmatprep.subr.bf16.mxu0 0
      %389 = vmatpush1.bf16.msra.mxu0 0
      %390 = vmatprep.subr.bf16.mxu0 0
      %391 = vmatpush1.bf16.msra.mxu0 0
      %392 = vmatprep.subr.bf16.mxu0 0
      %393 = vmatpush1.bf16.msra.mxu0 0
      %394 = vmatprep.mubr.bf16.mxu0 0
      %395 = vmatmul.mubr.bf16.gmra.mrb[0].mxu0 %v354
      %v396 = vpop.f32.mrb[0].mxu0
      %v397 = vadd.f32 %v347, %v396
      %v398 = vpop.f32.mrb[0].mxu0
      %v399 = vadd.f32 %v349, %v398
      %v400 = vpop.f32.mrb[0].mxu0
      %v401 = vpop.f32.mrb[0].mxu0
      %402 = vdwg.mxu0
      %s403 = scalar_lea.vmem %s2, 4
      %v404 = vld [vmem:[%s403] sm:$0x3]
      %v405 = vpack.c.bf16 %v292, %v292
      %v406 = vpack.c.bf16 %v293, %v293
      %v408 = vsel %vm301, %v404, 0
      %v411 = vsel %vm305, %v405, 0
      %v414 = vsel %vm305, %v406, 0
      %416 = vmatprep.subr.bf16.mxu0 %v414
      %417 = vmatpush1.bf16.msra.mxu0 %v411
      %418 = vmatprep.subr.bf16.mxu0 0
      %419 = vmatpush1.bf16.msra.mxu0 0
      %420 = vmatprep.subr.bf16.mxu0 0
      %421 = vmatpush1.bf16.msra.mxu0 0
      %422 = vmatprep.subr.bf16.mxu0 0
      %423 = vmatpush1.bf16.msra.mxu0 0
      %424 = vmatprep.subr.bf16.mxu0 0
      %425 = vmatpush1.bf16.msra.mxu0 0
      %426 = vmatprep.subr.bf16.mxu0 0
      %427 = vmatpush1.bf16.msra.mxu0 0
      %428 = vmatprep.subr.bf16.mxu0 0
      %429 = vmatpush1.bf16.msra.mxu0 0
      %430 = vmatprep.subr.bf16.mxu0 0
      %431 = vmatpush1.bf16.msra.mxu0 0
      %432 = vmatprep.subr.bf16.mxu0 0
      %433 = vmatpush1.bf16.msra.mxu0 0
      %434 = vmatprep.subr.bf16.mxu0 0
      %435 = vmatpush1.bf16.msra.mxu0 0
      %436 = vmatprep.subr.bf16.mxu0 0
      %437 = vmatpush1.bf16.msra.mxu0 0
      %438 = vmatprep.subr.bf16.mxu0 0
      %439 = vmatpush1.bf16.msra.mxu0 0
      %440 = vmatprep.subr.bf16.mxu0 0
      %441 = vmatpush1.bf16.msra.mxu0 0
      %442 = vmatprep.subr.bf16.mxu0 0
      %443 = vmatpush1.bf16.msra.mxu0 0
      %444 = vmatprep.subr.bf16.mxu0 0
      %445 = vmatpush1.bf16.msra.mxu0 0
      %446 = vmatprep.subr.bf16.mxu0 0
      %447 = vmatpush1.bf16.msra.mxu0 0
      %448 = vmatprep.mubr.bf16.mxu0 0
      %449 = vmatmul.mubr.bf16.gmra.mrb[0].mxu0 %v408
      %v450 = vpop.f32.mrb[0].mxu0
      %v451 = vadd.f32 0.0, %v450
      %v452 = vpop.f32.mrb[0].mxu0
      %v453 = vadd.f32 0.0, %v452
      %v454 = vpop.f32.mrb[0].mxu0
      %v455 = vpop.f32.mrb[0].mxu0
      %456 = vdwg.mxu0
      %v457 = vadd.f32 %v397, %v451
      %v458 = vadd.f32 %v399, %v453
      %459 = vrot.lane.b32.xlu0 %v199, 1
      %v460 = vpop.permute.xlu0 %459
      %461 = vrot.lane.b32.xlu0 %v210, 1
      %v462 = vpop.permute.xlu0 %461
      %v463 = vsel %vm258, %v460, %v462
      %v464 = vsel %vm258, %v462, %v460
      %465 = vrot.lane.b32.xlu0 %v199, 127
      %v466 = vpop.permute.xlu0 %465
      %467 = vrot.lane.b32.xlu0 %v210, 127
      %v468 = vpop.permute.xlu0 %467
      %v469 = vsel %vm265, %v466, %v468
      %v470 = vsel %vm265, %v468, %v466
      %v471 = vsel %vm277, %v469, %v464
      %v472 = vsel %vm278, %v470, %v463
      %v473 = vsel %vm290, %v464, %v469
      %v474 = vsel %vm291, %v463, %v470
      %s475 = scalar_lea.vmem %s2, 6
      %v476 = vld [vmem:[%s475] sm:$0x3]
      %v477 = vpack.c.bf16 %v471, %v471
      %v478 = vpack.c.bf16 %v472, %v472
      %v480 = vsel %vm301, %v476, 0
      %v483 = vsel %vm305, %v477, 0
      %v486 = vsel %vm305, %v478, 0
      %488 = vmatprep.subr.bf16.mxu0 %v486
      %489 = vmatpush1.bf16.msra.mxu0 %v483
      %490 = vmatprep.subr.bf16.mxu0 0
      %491 = vmatpush1.bf16.msra.mxu0 0
      %492 = vmatprep.subr.bf16.mxu0 0
      %493 = vmatpush1.bf16.msra.mxu0 0
      %494 = vmatprep.subr.bf16.mxu0 0
      %495 = vmatpush1.bf16.msra.mxu0 0
      %496 = vmatprep.subr.bf16.mxu0 0
      %497 = vmatpush1.bf16.msra.mxu0 0
      %498 = vmatprep.subr.bf16.mxu0 0
      %499 = vmatpush1.bf16.msra.mxu0 0
      %500 = vmatprep.subr.bf16.mxu0 0
      %501 = vmatpush1.bf16.msra.mxu0 0
      %502 = vmatprep.subr.bf16.mxu0 0
      %503 = vmatpush1.bf16.msra.mxu0 0
      %504 = vmatprep.subr.bf16.mxu0 0
      %505 = vmatpush1.bf16.msra.mxu0 0
      %506 = vmatprep.subr.bf16.mxu0 0
      %507 = vmatpush1.bf16.msra.mxu0 0
      %508 = vmatprep.subr.bf16.mxu0 0
      %509 = vmatpush1.bf16.msra.mxu0 0
      %510 = vmatprep.subr.bf16.mxu0 0
      %511 = vmatpush1.bf16.msra.mxu0 0
      %512 = vmatprep.subr.bf16.mxu0 0
      %513 = vmatpush1.bf16.msra.mxu0 0
      %514 = vmatprep.subr.bf16.mxu0 0
      %515 = vmatpush1.bf16.msra.mxu0 0
      %516 = vmatprep.subr.bf16.mxu0 0
      %517 = vmatpush1.bf16.msra.mxu0 0
      %518 = vmatprep.subr.bf16.mxu0 0
      %519 = vmatpush1.bf16.msra.mxu0 0
      %520 = vmatprep.mubr.bf16.mxu0 0
      %521 = vmatmul.mubr.bf16.gmra.mrb[0].mxu0 %v480
      %v522 = vpop.f32.mrb[0].mxu0
      %v523 = vadd.f32 0.0, %v522
      %v524 = vpop.f32.mrb[0].mxu0
      %v525 = vadd.f32 0.0, %v524
      %v526 = vpop.f32.mrb[0].mxu0
      %v527 = vpop.f32.mrb[0].mxu0
      %528 = vdwg.mxu0
      %v529 = vadd.f32 %v457, %v523
      %v530 = vadd.f32 %v458, %v525
      %s531 = scalar_lea.vmem %s2, 8
      %v532 = vld [vmem:[%s531] sm:$0x3]
      %v533 = vpack.c.bf16 %v199, %v199
      %v534 = vpack.c.bf16 %v210, %v210
      %v536 = vsel %vm301, %v532, 0
      %v539 = vsel %vm305, %v533, 0
      %v542 = vsel %vm305, %v534, 0
      %544 = vmatprep.subr.bf16.mxu0 %v542
      %545 = vmatpush1.bf16.msra.mxu0 %v539
      %546 = vmatprep.subr.bf16.mxu0 0
      %547 = vmatpush1.bf16.msra.mxu0 0
      %548 = vmatprep.subr.bf16.mxu0 0
      %549 = vmatpush1.bf16.msra.mxu0 0
      %550 = vmatprep.subr.bf16.mxu0 0
      %551 = vmatpush1.bf16.msra.mxu0 0
      %552 = vmatprep.subr.bf16.mxu0 0
      %553 = vmatpush1.bf16.msra.mxu0 0
      %554 = vmatprep.subr.bf16.mxu0 0
      %555 = vmatpush1.bf16.msra.mxu0 0
      %556 = vmatprep.subr.bf16.mxu0 0
      %557 = vmatpush1.bf16.msra.mxu0 0
      %558 = vmatprep.subr.bf16.mxu0 0
      %559 = vmatpush1.bf16.msra.mxu0 0
      %560 = vmatprep.subr.bf16.mxu0 0
      %561 = vmatpush1.bf16.msra.mxu0 0
      %562 = vmatprep.subr.bf16.mxu0 0
      %563 = vmatpush1.bf16.msra.mxu0 0
      %564 = vmatprep.subr.bf16.mxu0 0
      %565 = vmatpush1.bf16.msra.mxu0 0
      %566 = vmatprep.subr.bf16.mxu0 0
      %567 = vmatpush1.bf16.msra.mxu0 0
      %568 = vmatprep.subr.bf16.mxu0 0
      %569 = vmatpush1.bf16.msra.mxu0 0
      %570 = vmatprep.subr.bf16.mxu0 0
      %571 = vmatpush1.bf16.msra.mxu0 0
      %572 = vmatprep.subr.bf16.mxu0 0
      %573 = vmatpush1.bf16.msra.mxu0 0
      %574 = vmatprep.subr.bf16.mxu0 0
      %575 = vmatpush1.bf16.msra.mxu0 0
      %576 = vmatprep.mubr.bf16.mxu0 0
      %577 = vmatmul.mubr.bf16.gmra.mrb[0].mxu0 %v536
      %v578 = vpop.f32.mrb[0].mxu0
      %v579 = vadd.f32 0.0, %v578
      %v580 = vpop.f32.mrb[0].mxu0
      %v581 = vadd.f32 0.0, %v580
      %v582 = vpop.f32.mrb[0].mxu0
      %v583 = vpop.f32.mrb[0].mxu0
      %584 = vdwg.mxu0
      %v585 = vadd.f32 %v529, %v579
      %v586 = vadd.f32 %v530, %v581
      %s587 = scalar_lea.vmem %s2, 10
      %v588 = vld [vmem:[%s587] sm:$0x3]
      %v589 = vpack.c.bf16 %v473, %v473
      %v590 = vpack.c.bf16 %v474, %v474
      %v592 = vsel %vm301, %v588, 0
      %v595 = vsel %vm305, %v589, 0
      %v598 = vsel %vm305, %v590, 0
      %600 = vmatprep.subr.bf16.mxu0 %v598
      %601 = vmatpush1.bf16.msra.mxu0 %v595
      %602 = vmatprep.subr.bf16.mxu0 0
      %603 = vmatpush1.bf16.msra.mxu0 0
      %604 = vmatprep.subr.bf16.mxu0 0
      %605 = vmatpush1.bf16.msra.mxu0 0
      %606 = vmatprep.subr.bf16.mxu0 0
      %607 = vmatpush1.bf16.msra.mxu0 0
      %608 = vmatprep.subr.bf16.mxu0 0
      %609 = vmatpush1.bf16.msra.mxu0 0
      %610 = vmatprep.subr.bf16.mxu0 0
      %611 = vmatpush1.bf16.msra.mxu0 0
      %612 = vmatprep.subr.bf16.mxu0 0
      %613 = vmatpush1.bf16.msra.mxu0 0
      %614 = vmatprep.subr.bf16.mxu0 0
      %615 = vmatpush1.bf16.msra.mxu0 0
      %616 = vmatprep.subr.bf16.mxu0 0
      %617 = vmatpush1.bf16.msra.mxu0 0
      %618 = vmatprep.subr.bf16.mxu0 0
      %619 = vmatpush1.bf16.msra.mxu0 0
      %620 = vmatprep.subr.bf16.mxu0 0
      %621 = vmatpush1.bf16.msra.mxu0 0
      %622 = vmatprep.subr.bf16.mxu0 0
      %623 = vmatpush1.bf16.msra.mxu0 0
      %624 = vmatprep.subr.bf16.mxu0 0
      %625 = vmatpush1.bf16.msra.mxu0 0
      %626 = vmatprep.subr.bf16.mxu0 0
      %627 = vmatpush1.bf16.msra.mxu0 0
      %628 = vmatprep.subr.bf16.mxu0 0
      %629 = vmatpush1.bf16.msra.mxu0 0
      %630 = vmatprep.subr.bf16.mxu0 0
      %631 = vmatpush1.bf16.msra.mxu0 0
      %632 = vmatprep.mubr.bf16.mxu0 0
      %633 = vmatmul.mubr.bf16.gmra.mrb[0].mxu0 %v592
      %v634 = vpop.f32.mrb[0].mxu0
      %v635 = vadd.f32 0.0, %v634
      %v636 = vpop.f32.mrb[0].mxu0
      %v637 = vadd.f32 0.0, %v636
      %v638 = vpop.f32.mrb[0].mxu0
      %v639 = vpop.f32.mrb[0].mxu0
      %640 = vdwg.mxu0
      %v641 = vadd.f32 %v585, %v635
      %v642 = vadd.f32 %v586, %v637
      %643 = vrot.lane.b32.xlu0 %v252, 1
      %v644 = vpop.permute.xlu0 %643
      %645 = vrot.lane.b32.xlu0 %v253, 1
      %v646 = vpop.permute.xlu0 %645
      %v647 = vsel %vm258, %v644, %v646
      %v648 = vsel %vm258, %v646, %v644
      %649 = vrot.lane.b32.xlu0 %v252, 127
      %v650 = vpop.permute.xlu0 %649
      %651 = vrot.lane.b32.xlu0 %v253, 127
      %v652 = vpop.permute.xlu0 %651
      %v653 = vsel %vm265, %v650, %v652
      %v654 = vsel %vm265, %v652, %v650
      %v655 = vsel %vm277, %v653, %v648
      %v656 = vsel %vm278, %v654, %v647
      %v657 = vsel %vm290, %v648, %v653
      %v658 = vsel %vm291, %v647, %v654
      %s659 = scalar_lea.vmem %s2, 12
      %v660 = vld [vmem:[%s659] sm:$0x3]
      %v661 = vpack.c.bf16 %v655, %v655
      %v662 = vpack.c.bf16 %v656, %v656
      %v664 = vsel %vm301, %v660, 0
      %v667 = vsel %vm305, %v661, 0
      %v670 = vsel %vm305, %v662, 0
      %672 = vmatprep.subr.bf16.mxu0 %v670
      %673 = vmatpush1.bf16.msra.mxu0 %v667
      %674 = vmatprep.subr.bf16.mxu0 0
      %675 = vmatpush1.bf16.msra.mxu0 0
      %676 = vmatprep.subr.bf16.mxu0 0
      %677 = vmatpush1.bf16.msra.mxu0 0
      %678 = vmatprep.subr.bf16.mxu0 0
      %679 = vmatpush1.bf16.msra.mxu0 0
      %680 = vmatprep.subr.bf16.mxu0 0
      %681 = vmatpush1.bf16.msra.mxu0 0
      %682 = vmatprep.subr.bf16.mxu0 0
      %683 = vmatpush1.bf16.msra.mxu0 0
      %684 = vmatprep.subr.bf16.mxu0 0
      %685 = vmatpush1.bf16.msra.mxu0 0
      %686 = vmatprep.subr.bf16.mxu0 0
      %687 = vmatpush1.bf16.msra.mxu0 0
      %688 = vmatprep.subr.bf16.mxu0 0
      %689 = vmatpush1.bf16.msra.mxu0 0
      %690 = vmatprep.subr.bf16.mxu0 0
      %691 = vmatpush1.bf16.msra.mxu0 0
      %692 = vmatprep.subr.bf16.mxu0 0
      %693 = vmatpush1.bf16.msra.mxu0 0
      %694 = vmatprep.subr.bf16.mxu0 0
      %695 = vmatpush1.bf16.msra.mxu0 0
      %696 = vmatprep.subr.bf16.mxu0 0
      %697 = vmatpush1.bf16.msra.mxu0 0
      %698 = vmatprep.subr.bf16.mxu0 0
      %699 = vmatpush1.bf16.msra.mxu0 0
      %700 = vmatprep.subr.bf16.mxu0 0
      %701 = vmatpush1.bf16.msra.mxu0 0
      %702 = vmatprep.subr.bf16.mxu0 0
      %703 = vmatpush1.bf16.msra.mxu0 0
      %704 = vmatprep.mubr.bf16.mxu0 0
      %705 = vmatmul.mubr.bf16.gmra.mrb[0].mxu0 %v664
      %v706 = vpop.f32.mrb[0].mxu0
      %v707 = vadd.f32 0.0, %v706
      %v708 = vpop.f32.mrb[0].mxu0
      %v709 = vadd.f32 0.0, %v708
      %v710 = vpop.f32.mrb[0].mxu0
      %v711 = vpop.f32.mrb[0].mxu0
      %712 = vdwg.mxu0
      %v713 = vadd.f32 %v641, %v707
      %v714 = vadd.f32 %v642, %v709
      %s715 = scalar_lea.vmem %s2, 14
      %v716 = vld [vmem:[%s715] sm:$0x3]
      %v717 = vpack.c.bf16 %v252, %v252
      %v718 = vpack.c.bf16 %v253, %v253
      %v720 = vsel %vm301, %v716, 0
      %v723 = vsel %vm305, %v717, 0
      %v726 = vsel %vm305, %v718, 0
      %728 = vmatprep.subr.bf16.mxu0 %v726
      %729 = vmatpush1.bf16.msra.mxu0 %v723
      %730 = vmatprep.subr.bf16.mxu0 0
      %731 = vmatpush1.bf16.msra.mxu0 0
      %732 = vmatprep.subr.bf16.mxu0 0
      %733 = vmatpush1.bf16.msra.mxu0 0
      %734 = vmatprep.subr.bf16.mxu0 0
      %735 = vmatpush1.bf16.msra.mxu0 0
      %736 = vmatprep.subr.bf16.mxu0 0
      %737 = vmatpush1.bf16.msra.mxu0 0
      %738 = vmatprep.subr.bf16.mxu0 0
      %739 = vmatpush1.bf16.msra.mxu0 0
      %740 = vmatprep.subr.bf16.mxu0 0
      %741 = vmatpush1.bf16.msra.mxu0 0
      %742 = vmatprep.subr.bf16.mxu0 0
      %743 = vmatpush1.bf16.msra.mxu0 0
      %744 = vmatprep.subr.bf16.mxu0 0
      %745 = vmatpush1.bf16.msra.mxu0 0
      %746 = vmatprep.subr.bf16.mxu0 0
      %747 = vmatpush1.bf16.msra.mxu0 0
      %748 = vmatprep.subr.bf16.mxu0 0
      %749 = vmatpush1.bf16.msra.mxu0 0
      %750 = vmatprep.subr.bf16.mxu0 0
      %751 = vmatpush1.bf16.msra.mxu0 0
      %752 = vmatprep.subr.bf16.mxu0 0
      %753 = vmatpush1.bf16.msra.mxu0 0
      %754 = vmatprep.subr.bf16.mxu0 0
      %755 = vmatpush1.bf16.msra.mxu0 0
      %756 = vmatprep.subr.bf16.mxu0 0
      %757 = vmatpush1.bf16.msra.mxu0 0
      %758 = vmatprep.subr.bf16.mxu0 0
      %759 = vmatpush1.bf16.msra.mxu0 0
      %760 = vmatprep.mubr.bf16.mxu0 0
      %761 = vmatmul.mubr.bf16.gmra.mrb[0].mxu0 %v720
      %v762 = vpop.f32.mrb[0].mxu0
      %v763 = vadd.f32 0.0, %v762
      %v764 = vpop.f32.mrb[0].mxu0
      %v765 = vadd.f32 0.0, %v764
      %v766 = vpop.f32.mrb[0].mxu0
      %v767 = vpop.f32.mrb[0].mxu0
      %768 = vdwg.mxu0
      %v769 = vadd.f32 %v713, %v763
      %v770 = vadd.f32 %v714, %v765
      %s771 = scalar_lea.vmem %s2, 16
      %v772 = vld [vmem:[%s771] sm:$0x3]
      %v773 = vpack.c.bf16 %v657, %v657
      %v774 = vpack.c.bf16 %v658, %v658
      %v776 = vsel %vm301, %v772, 0
      %v779 = vsel %vm305, %v773, 0
      %v782 = vsel %vm305, %v774, 0
      %784 = vmatprep.subr.bf16.mxu0 %v782
      %785 = vmatpush1.bf16.msra.mxu0 %v779
      %786 = vmatprep.subr.bf16.mxu0 0
      %787 = vmatpush1.bf16.msra.mxu0 0
      %788 = vmatprep.subr.bf16.mxu0 0
      %789 = vmatpush1.bf16.msra.mxu0 0
      %790 = vmatprep.subr.bf16.mxu0 0
      %791 = vmatpush1.bf16.msra.mxu0 0
      %792 = vmatprep.subr.bf16.mxu0 0
      %793 = vmatpush1.bf16.msra.mxu0 0
      %794 = vmatprep.subr.bf16.mxu0 0
      %795 = vmatpush1.bf16.msra.mxu0 0
      %796 = vmatprep.subr.bf16.mxu0 0
      %797 = vmatpush1.bf16.msra.mxu0 0
      %798 = vmatprep.subr.bf16.mxu0 0
      %799 = vmatpush1.bf16.msra.mxu0 0
      %800 = vmatprep.subr.bf16.mxu0 0
      %801 = vmatpush1.bf16.msra.mxu0 0
      %802 = vmatprep.subr.bf16.mxu0 0
      %803 = vmatpush1.bf16.msra.mxu0 0
      %804 = vmatprep.subr.bf16.mxu0 0
      %805 = vmatpush1.bf16.msra.mxu0 0
      %806 = vmatprep.subr.bf16.mxu0 0
      %807 = vmatpush1.bf16.msra.mxu0 0
      %808 = vmatprep.subr.bf16.mxu0 0
      %809 = vmatpush1.bf16.msra.mxu0 0
      %810 = vmatprep.subr.bf16.mxu0 0
      %811 = vmatpush1.bf16.msra.mxu0 0
      %812 = vmatprep.subr.bf16.mxu0 0
      %813 = vmatpush1.bf16.msra.mxu0 0
      %814 = vmatprep.subr.bf16.mxu0 0
      %815 = vmatpush1.bf16.msra.mxu0 0
      %816 = vmatprep.mubr.bf16.mxu0 0
      %817 = vmatmul.mubr.bf16.gmra.mrb[0].mxu0 %v776
      %v818 = vpop.f32.mrb[0].mxu0
      %v819 = vadd.f32 0.0, %v818
      %v820 = vpop.f32.mrb[0].mxu0
      %v821 = vadd.f32 0.0, %v820
      %v822 = vpop.f32.mrb[0].mxu0
      %v823 = vpop.f32.mrb[0].mxu0
      %824 = vdwg.mxu0
      %v825 = vadd.f32 %v769, %v819
      %v826 = vadd.f32 %v770, %v821
      %vm827 = vcmask 1043456
      %v828 = vsel %vm827, %v825, 0.0
      %v829 = vsel %vm827, %v826, 0.0
      %v830 = vadd.f32 %v828, %v829
      %831 = vadd.xlane.f32.xlu0 %v830
      %v832 = vpop.xlane.xlu0 %831
      %v833 = vrcp.pop 256.0
      %v834 = vmul.f32 %v832, %v833
      %v835 = vsub.f32 %v825, %v834
      %v836 = vsub.f32 %v826, %v834
      %v837 = vmul.f32 %v835, %v835
      %v838 = vmul.f32 %v836, %v836
      %v839 = vsel %vm827, %v837, 0.0
      %v840 = vsel %vm827, %v838, 0.0
      %v841 = vadd.f32 %v839, %v840
      %842 = vadd.xlane.f32.xlu0 %v841
      %v843 = vpop.xlane.xlu0 %842
      %v844 = vmul.f32 %v843, %v833
      %v845 = vadd.f32 %v844, 1e-05
      %v846 = vrsqrt.pop %v845
      %v847 = vmul.f32 %v835, %v846
      %v848 = vmul.f32 %v836, %v846
      %v849 = vmax.f32 %v847, 0.0
      %v850 = vmax.f32 %v848, 0.0
      %851 = vrot.lane.b32.xlu0 %v849, 16
      %v852 = vpop.permute.xlu0 %851
      %853 = vrot.lane.b32.xlu0 %v850, 16
      %v854 = vpop.permute.xlu0 %853
      %v855 = vsel %vm218, %v852, %v854
      %v856 = vsel %vm218, %v854, %v852
      %857 = vrot.lane.b32.xlu0 %v849, 112
      %v858 = vpop.permute.xlu0 %857
      %859 = vrot.lane.b32.xlu0 %v850, 112
      %v860 = vpop.permute.xlu0 %859
      %v861 = vsel %vm225, %v858, %v860
      %v862 = vsel %vm225, %v860, %v858
      %v863 = vsel %vm237, %v861, %v856
      %v864 = vsel %vm238, %v862, %v855
      %v865 = vsel %vm250, %v856, %v861
      %v866 = vsel %vm251, %v855, %v862
      %867 = vrot.lane.b32.xlu0 %v863, 1
      %v868 = vpop.permute.xlu0 %867
      %869 = vrot.lane.b32.xlu0 %v864, 1
      %v870 = vpop.permute.xlu0 %869
      %v871 = vsel %vm258, %v868, %v870
      %v872 = vsel %vm258, %v870, %v868
      %873 = vrot.lane.b32.xlu0 %v863, 127
      %v874 = vpop.permute.xlu0 %873
      %875 = vrot.lane.b32.xlu0 %v864, 127
      %v876 = vpop.permute.xlu0 %875
      %v877 = vsel %vm265, %v874, %v876
      %v878 = vsel %vm265, %v876, %v874
      %v879 = vsel %vm277, %v877, %v872
      %v880 = vsel %vm278, %v878, %v871
      %v881 = vsel %vm290, %v872, %v877
      %v882 = vsel %vm291, %v871, %v878
      %v883 = vld [vmem:[%s3] sm:$0x3]
      %v884 = vpack.c.bf16 %v879, %v879
      %v885 = vpack.c.bf16 %v880, %v880
      %s886 = scalar_lea.vmem %s3, 2
      %v887 = vld [vmem:[%s886] sm:$0x3]
      %v888 = vpack.c.bf16 %v863, %v863
      %v889 = vpack.c.bf16 %v864, %v864
      %v891 = vsel %vm301, %v887, 0
      %v894 = vsel %vm305, %v888, 0
      %v897 = vsel %vm305, %v889, 0
      %899 = vmatprep.subr.bf16.mxu0 %v897
      %900 = vmatpush1.bf16.msra.mxu0 %v894
      %901 = vmatprep.subr.bf16.mxu0 0
      %902 = vmatpush1.bf16.msra.mxu0 0
      %903 = vmatprep.subr.bf16.mxu0 0
      %904 = vmatpush1.bf16.msra.mxu0 0
      %905 = vmatprep.subr.bf16.mxu0 0
      %906 = vmatpush1.bf16.msra.mxu0 0
      %907 = vmatprep.subr.bf16.mxu0 0
      %908 = vmatpush1.bf16.msra.mxu0 0
      %909 = vmatprep.subr.bf16.mxu0 0
      %910 = vmatpush1.bf16.msra.mxu0 0
      %911 = vmatprep.subr.bf16.mxu0 0
      %912 = vmatpush1.bf16.msra.mxu0 0
      %913 = vmatprep.subr.bf16.mxu0 0
      %914 = vmatpush1.bf16.msra.mxu0 0
      %915 = vmatprep.subr.bf16.mxu0 0
      %916 = vmatpush1.bf16.msra.mxu0 0
      %917 = vmatprep.subr.bf16.mxu0 0
      %918 = vmatpush1.bf16.msra.mxu0 0
      %919 = vmatprep.subr.bf16.mxu0 0
      %920 = vmatpush1.bf16.msra.mxu0 0
      %921 = vmatprep.subr.bf16.mxu0 0
      %922 = vmatpush1.bf16.msra.mxu0 0
      %923 = vmatprep.subr.bf16.mxu0 0
      %924 = vmatpush1.bf16.msra.mxu0 0
      %925 = vmatprep.subr.bf16.mxu0 0
      %926 = vmatpush1.bf16.msra.mxu0 0
      %927 = vmatprep.subr.bf16.mxu0 0
      %928 = vmatpush1.bf16.msra.mxu0 0
      %929 = vmatprep.subr.bf16.mxu0 0
      %930 = vmatpush1.bf16.msra.mxu0 0
      %931 = vmatprep.mubr.bf16.mxu0 0
      %932 = vmatmul.mubr.bf16.gmra.mrb[0].mxu0 %v891
      %v933 = vpop.f32.mrb[0].mxu0
      %v934 = vadd.f32 0.0, %v933
      %v935 = vpop.f32.mrb[0].mxu0
      %v936 = vadd.f32 0.0, %v935
      %v937 = vpop.f32.mrb[0].mxu0
      %v938 = vpop.f32.mrb[0].mxu0
      %939 = vdwg.mxu0
      %v941 = vsel %vm301, %v883, 0
      %v944 = vsel %vm305, %v884, 0
      %v947 = vsel %vm305, %v885, 0
      %949 = vmatprep.subr.bf16.mxu0 %v947
      %950 = vmatpush1.bf16.msra.mxu0 %v944
      %951 = vmatprep.subr.bf16.mxu0 0
      %952 = vmatpush1.bf16.msra.mxu0 0
      %953 = vmatprep.subr.bf16.mxu0 0
      %954 = vmatpush1.bf16.msra.mxu0 0
      %955 = vmatprep.subr.bf16.mxu0 0
      %956 = vmatpush1.bf16.msra.mxu0 0
      %957 = vmatprep.subr.bf16.mxu0 0
      %958 = vmatpush1.bf16.msra.mxu0 0
      %959 = vmatprep.subr.bf16.mxu0 0
      %960 = vmatpush1.bf16.msra.mxu0 0
      %961 = vmatprep.subr.bf16.mxu0 0
      %962 = vmatpush1.bf16.msra.mxu0 0
      %963 = vmatprep.subr.bf16.mxu0 0
      %964 = vmatpush1.bf16.msra.mxu0 0
      %965 = vmatprep.subr.bf16.mxu0 0
      %966 = vmatpush1.bf16.msra.mxu0 0
      %967 = vmatprep.subr.bf16.mxu0 0
      %968 = vmatpush1.bf16.msra.mxu0 0
      %969 = vmatprep.subr.bf16.mxu0 0
      %970 = vmatpush1.bf16.msra.mxu0 0
      %971 = vmatprep.subr.bf16.mxu0 0
      %972 = vmatpush1.bf16.msra.mxu0 0
      %973 = vmatprep.subr.bf16.mxu0 0
      %974 = vmatpush1.bf16.msra.mxu0 0
      %975 = vmatprep.subr.bf16.mxu0 0
      %976 = vmatpush1.bf16.msra.mxu0 0
      %977 = vmatprep.subr.bf16.mxu0 0
      %978 = vmatpush1.bf16.msra.mxu0 0
      %979 = vmatprep.subr.bf16.mxu0 0
      %980 = vmatpush1.bf16.msra.mxu0 0
      %981 = vmatprep.mubr.bf16.mxu0 0
      %982 = vmatmul.mubr.bf16.gmra.mrb[0].mxu0 %v941
      %v983 = vpop.f32.mrb[0].mxu0
      %v984 = vadd.f32 %v934, %v983
      %v985 = vpop.f32.mrb[0].mxu0
      %v986 = vadd.f32 %v936, %v985
      %v987 = vpop.f32.mrb[0].mxu0
      %v988 = vpop.f32.mrb[0].mxu0
      %989 = vdwg.mxu0
      %s990 = scalar_lea.vmem %s3, 4
      %v991 = vld [vmem:[%s990] sm:$0x3]
      %v992 = vpack.c.bf16 %v881, %v881
      %v993 = vpack.c.bf16 %v882, %v882
      %v995 = vsel %vm301, %v991, 0
      %v998 = vsel %vm305, %v992, 0
      %v1001 = vsel %vm305, %v993, 0
      %1003 = vmatprep.subr.bf16.mxu0 %v1001
      %1004 = vmatpush1.bf16.msra.mxu0 %v998
      %1005 = vmatprep.subr.bf16.mxu0 0
      %1006 = vmatpush1.bf16.msra.mxu0 0
      %1007 = vmatprep.subr.bf16.mxu0 0
      %1008 = vmatpush1.bf16.msra.mxu0 0
      %1009 = vmatprep.subr.bf16.mxu0 0
      %1010 = vmatpush1.bf16.msra.mxu0 0
      %1011 = vmatprep.subr.bf16.mxu0 0
      %1012 = vmatpush1.bf16.msra.mxu0 0
      %1013 = vmatprep.subr.bf16.mxu0 0
      %1014 = vmatpush1.bf16.msra.mxu0 0
      %1015 = vmatprep.subr.bf16.mxu0 0
      %1016 = vmatpush1.bf16.msra.mxu0 0
      %1017 = vmatprep.subr.bf16.mxu0 0
      %1018 = vmatpush1.bf16.msra.mxu0 0
      %1019 = vmatprep.subr.bf16.mxu0 0
      %1020 = vmatpush1.bf16.msra.mxu0 0
      %1021 = vmatprep.subr.bf16.mxu0 0
      %1022 = vmatpush1.bf16.msra.mxu0 0
      %1023 = vmatprep.subr.bf16.mxu0 0
      %1024 = vmatpush1.bf16.msra.mxu0 0
      %1025 = vmatprep.subr.bf16.mxu0 0
      %1026 = vmatpush1.bf16.msra.mxu0 0
      %1027 = vmatprep.subr.bf16.mxu0 0
      %1028 = vmatpush1.bf16.msra.mxu0 0
      %1029 = vmatprep.subr.bf16.mxu0 0
      %1030 = vmatpush1.bf16.msra.mxu0 0
      %1031 = vmatprep.subr.bf16.mxu0 0
      %1032 = vmatpush1.bf16.msra.mxu0 0
      %1033 = vmatprep.subr.bf16.mxu0 0
      %1034 = vmatpush1.bf16.msra.mxu0 0
      %1035 = vmatprep.mubr.bf16.mxu0 0
      %1036 = vmatmul.mubr.bf16.gmra.mrb[0].mxu0 %v995
      %v1037 = vpop.f32.mrb[0].mxu0
      %v1038 = vadd.f32 0.0, %v1037
      %v1039 = vpop.f32.mrb[0].mxu0
      %v1040 = vadd.f32 0.0, %v1039
      %v1041 = vpop.f32.mrb[0].mxu0
      %v1042 = vpop.f32.mrb[0].mxu0
      %1043 = vdwg.mxu0
      %v1044 = vadd.f32 %v984, %v1038
      %v1045 = vadd.f32 %v986, %v1040
      %1046 = vrot.lane.b32.xlu0 %v849, 1
      %v1047 = vpop.permute.xlu0 %1046
      %1048 = vrot.lane.b32.xlu0 %v850, 1
      %v1049 = vpop.permute.xlu0 %1048
      %v1050 = vsel %vm258, %v1047, %v1049
      %v1051 = vsel %vm258, %v1049, %v1047
      %1052 = vrot.lane.b32.xlu0 %v849, 127
      %v1053 = vpop.permute.xlu0 %1052
      %1054 = vrot.lane.b32.xlu0 %v850, 127
      %v1055 = vpop.permute.xlu0 %1054
      %v1056 = vsel %vm265, %v1053, %v1055
      %v1057 = vsel %vm265, %v1055, %v1053
      %v1058 = vsel %vm277, %v1056, %v1051
      %v1059 = vsel %vm278, %v1057, %v1050
      %v1060 = vsel %vm290, %v1051, %v1056
      %v1061 = vsel %vm291, %v1050, %v1057
      %s1062 = scalar_lea.vmem %s3, 6
      %v1063 = vld [vmem:[%s1062] sm:$0x3]
      %v1064 = vpack.c.bf16 %v1058, %v1058
      %v1065 = vpack.c.bf16 %v1059, %v1059
      %v1067 = vsel %vm301, %v1063, 0
      %v1070 = vsel %vm305, %v1064, 0
      %v1073 = vsel %vm305, %v1065, 0
      %1075 = vmatprep.subr.bf16.mxu0 %v1073
      %1076 = vmatpush1.bf16.msra.mxu0 %v1070
      %1077 = vmatprep.subr.bf16.mxu0 0
      %1078 = vmatpush1.bf16.msra.mxu0 0
      %1079 = vmatprep.subr.bf16.mxu0 0
      %1080 = vmatpush1.bf16.msra.mxu0 0
      %1081 = vmatprep.subr.bf16.mxu0 0
      %1082 = vmatpush1.bf16.msra.mxu0 0
      %1083 = vmatprep.subr.bf16.mxu0 0
      %1084 = vmatpush1.bf16.msra.mxu0 0
      %1085 = vmatprep.subr.bf16.mxu0 0
      %1086 = vmatpush1.bf16.msra.mxu0 0
      %1087 = vmatprep.subr.bf16.mxu0 0
      %1088 = vmatpush1.bf16.msra.mxu0 0
      %1089 = vmatprep.subr.bf16.mxu0 0
      %1090 = vmatpush1.bf16.msra.mxu0 0
      %1091 = vmatprep.subr.bf16.mxu0 0
      %1092 = vmatpush1.bf16.msra.mxu0 0
      %1093 = vmatprep.subr.bf16.mxu0 0
      %1094 = vmatpush1.bf16.msra.mxu0 0
      %1095 = vmatprep.subr.bf16.mxu0 0
      %1096 = vmatpush1.bf16.msra.mxu0 0
      %1097 = vmatprep.subr.bf16.mxu0 0
      %1098 = vmatpush1.bf16.msra.mxu0 0
      %1099 = vmatprep.subr.bf16.mxu0 0
      %1100 = vmatpush1.bf16.msra.mxu0 0
      %1101 = vmatprep.subr.bf16.mxu0 0
      %1102 = vmatpush1.bf16.msra.mxu0 0
      %1103 = vmatprep.subr.bf16.mxu0 0
      %1104 = vmatpush1.bf16.msra.mxu0 0
      %1105 = vmatprep.subr.bf16.mxu0 0
      %1106 = vmatpush1.bf16.msra.mxu0 0
      %1107 = vmatprep.mubr.bf16.mxu0 0
      %1108 = vmatmul.mubr.bf16.gmra.mrb[0].mxu0 %v1067
      %v1109 = vpop.f32.mrb[0].mxu0
      %v1110 = vadd.f32 0.0, %v1109
      %v1111 = vpop.f32.mrb[0].mxu0
      %v1112 = vadd.f32 0.0, %v1111
      %v1113 = vpop.f32.mrb[0].mxu0
      %v1114 = vpop.f32.mrb[0].mxu0
      %1115 = vdwg.mxu0
      %v1116 = vadd.f32 %v1044, %v1110
      %v1117 = vadd.f32 %v1045, %v1112
      %s1118 = scalar_lea.vmem %s3, 8
      %v1119 = vld [vmem:[%s1118] sm:$0x3]
      %v1120 = vpack.c.bf16 %v849, %v849
      %v1121 = vpack.c.bf16 %v850, %v850
      %v1123 = vsel %vm301, %v1119, 0
      %v1126 = vsel %vm305, %v1120, 0
      %v1129 = vsel %vm305, %v1121, 0
      %1131 = vmatprep.subr.bf16.mxu0 %v1129
      %1132 = vmatpush1.bf16.msra.mxu0 %v1126
      %1133 = vmatprep.subr.bf16.mxu0 0
      %1134 = vmatpush1.bf16.msra.mxu0 0
      %1135 = vmatprep.subr.bf16.mxu0 0
      %1136 = vmatpush1.bf16.msra.mxu0 0
      %1137 = vmatprep.subr.bf16.mxu0 0
      %1138 = vmatpush1.bf16.msra.mxu0 0
      %1139 = vmatprep.subr.bf16.mxu0 0
      %1140 = vmatpush1.bf16.msra.mxu0 0
      %1141 = vmatprep.subr.bf16.mxu0 0
      %1142 = vmatpush1.bf16.msra.mxu0 0
      %1143 = vmatprep.subr.bf16.mxu0 0
      %1144 = vmatpush1.bf16.msra.mxu0 0
      %1145 = vmatprep.subr.bf16.mxu0 0
      %1146 = vmatpush1.bf16.msra.mxu0 0
      %1147 = vmatprep.subr.bf16.mxu0 0
      %1148 = vmatpush1.bf16.msra.mxu0 0
      %1149 = vmatprep.subr.bf16.mxu0 0
      %1150 = vmatpush1.bf16.msra.mxu0 0
      %1151 = vmatprep.subr.bf16.mxu0 0
      %1152 = vmatpush1.bf16.msra.mxu0 0
      %1153 = vmatprep.subr.bf16.mxu0 0
      %1154 = vmatpush1.bf16.msra.mxu0 0
      %1155 = vmatprep.subr.bf16.mxu0 0
      %1156 = vmatpush1.bf16.msra.mxu0 0
      %1157 = vmatprep.subr.bf16.mxu0 0
      %1158 = vmatpush1.bf16.msra.mxu0 0
      %1159 = vmatprep.subr.bf16.mxu0 0
      %1160 = vmatpush1.bf16.msra.mxu0 0
      %1161 = vmatprep.subr.bf16.mxu0 0
      %1162 = vmatpush1.bf16.msra.mxu0 0
      %1163 = vmatprep.mubr.bf16.mxu0 0
      %1164 = vmatmul.mubr.bf16.gmra.mrb[0].mxu0 %v1123
      %v1165 = vpop.f32.mrb[0].mxu0
      %v1166 = vadd.f32 0.0, %v1165
      %v1167 = vpop.f32.mrb[0].mxu0
      %v1168 = vadd.f32 0.0, %v1167
      %v1169 = vpop.f32.mrb[0].mxu0
      %v1170 = vpop.f32.mrb[0].mxu0
      %1171 = vdwg.mxu0
      %v1172 = vadd.f32 %v1116, %v1166
      %v1173 = vadd.f32 %v1117, %v1168
      %s1174 = scalar_lea.vmem %s3, 10
      %v1175 = vld [vmem:[%s1174] sm:$0x3]
      %v1176 = vpack.c.bf16 %v1060, %v1060
      %v1177 = vpack.c.bf16 %v1061, %v1061
      %v1179 = vsel %vm301, %v1175, 0
      %v1182 = vsel %vm305, %v1176, 0
      %v1185 = vsel %vm305, %v1177, 0
      %1187 = vmatprep.subr.bf16.mxu0 %v1185
      %1188 = vmatpush1.bf16.msra.mxu0 %v1182
      %1189 = vmatprep.subr.bf16.mxu0 0
      %1190 = vmatpush1.bf16.msra.mxu0 0
      %1191 = vmatprep.subr.bf16.mxu0 0
      %1192 = vmatpush1.bf16.msra.mxu0 0
      %1193 = vmatprep.subr.bf16.mxu0 0
      %1194 = vmatpush1.bf16.msra.mxu0 0
      %1195 = vmatprep.subr.bf16.mxu0 0
      %1196 = vmatpush1.bf16.msra.mxu0 0
      %1197 = vmatprep.subr.bf16.mxu0 0
      %1198 = vmatpush1.bf16.msra.mxu0 0
      %1199 = vmatprep.subr.bf16.mxu0 0
      %1200 = vmatpush1.bf16.msra.mxu0 0
      %1201 = vmatprep.subr.bf16.mxu0 0
      %1202 = vmatpush1.bf16.msra.mxu0 0
      %1203 = vmatprep.subr.bf16.mxu0 0
      %1204 = vmatpush1.bf16.msra.mxu0 0
      %1205 = vmatprep.subr.bf16.mxu0 0
      %1206 = vmatpush1.bf16.msra.mxu0 0
      %1207 = vmatprep.subr.bf16.mxu0 0
      %1208 = vmatpush1.bf16.msra.mxu0 0
      %1209 = vmatprep.subr.bf16.mxu0 0
      %1210 = vmatpush1.bf16.msra.mxu0 0
      %1211 = vmatprep.subr.bf16.mxu0 0
      %1212 = vmatpush1.bf16.msra.mxu0 0
      %1213 = vmatprep.subr.bf16.mxu0 0
      %1214 = vmatpush1.bf16.msra.mxu0 0
      %1215 = vmatprep.subr.bf16.mxu0 0
      %1216 = vmatpush1.bf16.msra.mxu0 0
      %1217 = vmatprep.subr.bf16.mxu0 0
      %1218 = vmatpush1.bf16.msra.mxu0 0
      %1219 = vmatprep.mubr.bf16.mxu0 0
      %1220 = vmatmul.mubr.bf16.gmra.mrb[0].mxu0 %v1179
      %v1221 = vpop.f32.mrb[0].mxu0
      %v1222 = vadd.f32 0.0, %v1221
      %v1223 = vpop.f32.mrb[0].mxu0
      %v1224 = vadd.f32 0.0, %v1223
      %v1225 = vpop.f32.mrb[0].mxu0
      %v1226 = vpop.f32.mrb[0].mxu0
      %1227 = vdwg.mxu0
      %v1228 = vadd.f32 %v1172, %v1222
      %v1229 = vadd.f32 %v1173, %v1224
      %1230 = vrot.lane.b32.xlu0 %v865, 1
      %v1231 = vpop.permute.xlu0 %1230
      %1232 = vrot.lane.b32.xlu0 %v866, 1
      %v1233 = vpop.permute.xlu0 %1232
      %v1234 = vsel %vm258, %v1231, %v1233
      %v1235 = vsel %vm258, %v1233, %v1231
      %1236 = vrot.lane.b32.xlu0 %v865, 127
      %v1237 = vpop.permute.xlu0 %1236
      %1238 = vrot.lane.b32.xlu0 %v866, 127
      %v1239 = vpop.permute.xlu0 %1238
      %v1240 = vsel %vm265, %v1237, %v1239
      %v1241 = vsel %vm265, %v1239, %v1237
      %v1242 = vsel %vm277, %v1240, %v1235
      %v1243 = vsel %vm278, %v1241, %v1234
      %v1244 = vsel %vm290, %v1235, %v1240
      %v1245 = vsel %vm291, %v1234, %v1241
      %s1246 = scalar_lea.vmem %s3, 12
      %v1247 = vld [vmem:[%s1246] sm:$0x3]
      %v1248 = vpack.c.bf16 %v1242, %v1242
      %v1249 = vpack.c.bf16 %v1243, %v1243
      %v1251 = vsel %vm301, %v1247, 0
      %v1254 = vsel %vm305, %v1248, 0
      %v1257 = vsel %vm305, %v1249, 0
      %1259 = vmatprep.subr.bf16.mxu0 %v1257
      %1260 = vmatpush1.bf16.msra.mxu0 %v1254
      %1261 = vmatprep.subr.bf16.mxu0 0
      %1262 = vmatpush1.bf16.msra.mxu0 0
      %1263 = vmatprep.subr.bf16.mxu0 0
      %1264 = vmatpush1.bf16.msra.mxu0 0
      %1265 = vmatprep.subr.bf16.mxu0 0
      %1266 = vmatpush1.bf16.msra.mxu0 0
      %1267 = vmatprep.subr.bf16.mxu0 0
      %1268 = vmatpush1.bf16.msra.mxu0 0
      %1269 = vmatprep.subr.bf16.mxu0 0
      %1270 = vmatpush1.bf16.msra.mxu0 0
      %1271 = vmatprep.subr.bf16.mxu0 0
      %1272 = vmatpush1.bf16.msra.mxu0 0
      %1273 = vmatprep.subr.bf16.mxu0 0
      %1274 = vmatpush1.bf16.msra.mxu0 0
      %1275 = vmatprep.subr.bf16.mxu0 0
      %1276 = vmatpush1.bf16.msra.mxu0 0
      %1277 = vmatprep.subr.bf16.mxu0 0
      %1278 = vmatpush1.bf16.msra.mxu0 0
      %1279 = vmatprep.subr.bf16.mxu0 0
      %1280 = vmatpush1.bf16.msra.mxu0 0
      %1281 = vmatprep.subr.bf16.mxu0 0
      %1282 = vmatpush1.bf16.msra.mxu0 0
      %1283 = vmatprep.subr.bf16.mxu0 0
      %1284 = vmatpush1.bf16.msra.mxu0 0
      %1285 = vmatprep.subr.bf16.mxu0 0
      %1286 = vmatpush1.bf16.msra.mxu0 0
      %1287 = vmatprep.subr.bf16.mxu0 0
      %1288 = vmatpush1.bf16.msra.mxu0 0
      %1289 = vmatprep.subr.bf16.mxu0 0
      %1290 = vmatpush1.bf16.msra.mxu0 0
      %1291 = vmatprep.mubr.bf16.mxu0 0
      %1292 = vmatmul.mubr.bf16.gmra.mrb[0].mxu0 %v1251
      %v1293 = vpop.f32.mrb[0].mxu0
      %v1294 = vadd.f32 0.0, %v1293
      %v1295 = vpop.f32.mrb[0].mxu0
      %v1296 = vadd.f32 0.0, %v1295
      %v1297 = vpop.f32.mrb[0].mxu0
      %v1298 = vpop.f32.mrb[0].mxu0
      %1299 = vdwg.mxu0
      %v1300 = vadd.f32 %v1228, %v1294
      %v1301 = vadd.f32 %v1229, %v1296
      %s1302 = scalar_lea.vmem %s3, 14
      %v1303 = vld [vmem:[%s1302] sm:$0x3]
      %v1304 = vpack.c.bf16 %v865, %v865
      %v1305 = vpack.c.bf16 %v866, %v866
      %v1307 = vsel %vm301, %v1303, 0
      %v1310 = vsel %vm305, %v1304, 0
      %v1313 = vsel %vm305, %v1305, 0
      %1315 = vmatprep.subr.bf16.mxu0 %v1313
      %1316 = vmatpush1.bf16.msra.mxu0 %v1310
      %1317 = vmatprep.subr.bf16.mxu0 0
      %1318 = vmatpush1.bf16.msra.mxu0 0
      %1319 = vmatprep.subr.bf16.mxu0 0
      %1320 = vmatpush1.bf16.msra.mxu0 0
      %1321 = vmatprep.subr.bf16.mxu0 0
      %1322 = vmatpush1.bf16.msra.mxu0 0
      %1323 = vmatprep.subr.bf16.mxu0 0
      %1324 = vmatpush1.bf16.msra.mxu0 0
      %1325 = vmatprep.subr.bf16.mxu0 0
      %1326 = vmatpush1.bf16.msra.mxu0 0
      %1327 = vmatprep.subr.bf16.mxu0 0
      %1328 = vmatpush1.bf16.msra.mxu0 0
      %1329 = vmatprep.subr.bf16.mxu0 0
      %1330 = vmatpush1.bf16.msra.mxu0 0
      %1331 = vmatprep.subr.bf16.mxu0 0
      %1332 = vmatpush1.bf16.msra.mxu0 0
      %1333 = vmatprep.subr.bf16.mxu0 0
      %1334 = vmatpush1.bf16.msra.mxu0 0
      %1335 = vmatprep.subr.bf16.mxu0 0
      %1336 = vmatpush1.bf16.msra.mxu0 0
      %1337 = vmatprep.subr.bf16.mxu0 0
      %1338 = vmatpush1.bf16.msra.mxu0 0
      %1339 = vmatprep.subr.bf16.mxu0 0
      %1340 = vmatpush1.bf16.msra.mxu0 0
      %1341 = vmatprep.subr.bf16.mxu0 0
      %1342 = vmatpush1.bf16.msra.mxu0 0
      %1343 = vmatprep.subr.bf16.mxu0 0
      %1344 = vmatpush1.bf16.msra.mxu0 0
      %1345 = vmatprep.subr.bf16.mxu0 0
      %1346 = vmatpush1.bf16.msra.mxu0 0
      %1347 = vmatprep.mubr.bf16.mxu0 0
      %1348 = vmatmul.mubr.bf16.gmra.mrb[0].mxu0 %v1307
      %v1349 = vpop.f32.mrb[0].mxu0
      %v1350 = vadd.f32 0.0, %v1349
      %v1351 = vpop.f32.mrb[0].mxu0
      %v1352 = vadd.f32 0.0, %v1351
      %v1353 = vpop.f32.mrb[0].mxu0
      %v1354 = vpop.f32.mrb[0].mxu0
      %1355 = vdwg.mxu0
      %v1356 = vadd.f32 %v1300, %v1350
      %v1357 = vadd.f32 %v1301, %v1352
      %s1358 = scalar_lea.vmem %s3, 16
      %v1359 = vld [vmem:[%s1358] sm:$0x3]
      %v1360 = vpack.c.bf16 %v1244, %v1244
      %v1361 = vpack.c.bf16 %v1245, %v1245
      %v1363 = vsel %vm301, %v1359, 0
      %v1366 = vsel %vm305, %v1360, 0
      %v1369 = vsel %vm305, %v1361, 0
      %1371 = vmatprep.subr.bf16.mxu0 %v1369
      %1372 = vmatpush1.bf16.msra.mxu0 %v1366
      %1373 = vmatprep.subr.bf16.mxu0 0
      %1374 = vmatpush1.bf16.msra.mxu0 0
      %1375 = vmatprep.subr.bf16.mxu0 0
      %1376 = vmatpush1.bf16.msra.mxu0 0
      %1377 = vmatprep.subr.bf16.mxu0 0
      %1378 = vmatpush1.bf16.msra.mxu0 0
      %1379 = vmatprep.subr.bf16.mxu0 0
      %1380 = vmatpush1.bf16.msra.mxu0 0
      %1381 = vmatprep.subr.bf16.mxu0 0
      %1382 = vmatpush1.bf16.msra.mxu0 0
      %1383 = vmatprep.subr.bf16.mxu0 0
      %1384 = vmatpush1.bf16.msra.mxu0 0
      %1385 = vmatprep.subr.bf16.mxu0 0
      %1386 = vmatpush1.bf16.msra.mxu0 0
      %1387 = vmatprep.subr.bf16.mxu0 0
      %1388 = vmatpush1.bf16.msra.mxu0 0
      %1389 = vmatprep.subr.bf16.mxu0 0
      %1390 = vmatpush1.bf16.msra.mxu0 0
      %1391 = vmatprep.subr.bf16.mxu0 0
      %1392 = vmatpush1.bf16.msra.mxu0 0
      %1393 = vmatprep.subr.bf16.mxu0 0
      %1394 = vmatpush1.bf16.msra.mxu0 0
      %1395 = vmatprep.subr.bf16.mxu0 0
      %1396 = vmatpush1.bf16.msra.mxu0 0
      %1397 = vmatprep.subr.bf16.mxu0 0
      %1398 = vmatpush1.bf16.msra.mxu0 0
      %1399 = vmatprep.subr.bf16.mxu0 0
      %1400 = vmatpush1.bf16.msra.mxu0 0
      %1401 = vmatprep.subr.bf16.mxu0 0
      %1402 = vmatpush1.bf16.msra.mxu0 0
      %1403 = vmatprep.mubr.bf16.mxu0 0
      %1404 = vmatmul.mubr.bf16.gmra.mrb[0].mxu0 %v1363
      %v1405 = vpop.f32.mrb[0].mxu0
      %v1406 = vadd.f32 0.0, %v1405
      %v1407 = vpop.f32.mrb[0].mxu0
      %v1408 = vadd.f32 0.0, %v1407
      %v1409 = vpop.f32.mrb[0].mxu0
      %v1410 = vpop.f32.mrb[0].mxu0
      %1411 = vdwg.mxu0
      %v1412 = vadd.f32 %v1356, %v1406
      %v1413 = vadd.f32 %v1357, %v1408
      %v1414 = vsel %vm827, %v1412, 0.0
      %v1415 = vsel %vm827, %v1413, 0.0
      %v1416 = vadd.f32 %v1414, %v1415
      %1417 = vadd.xlane.f32.xlu0 %v1416
      %v1418 = vpop.xlane.xlu0 %1417
      %v1419 = vmul.f32 %v1418, %v833
      %v1420 = vsub.f32 %v1412, %v1419
      %v1421 = vsub.f32 %v1413, %v1419
      %v1422 = vmul.f32 %v1420, %v1420
      %v1423 = vmul.f32 %v1421, %v1421
      %v1424 = vsel %vm827, %v1422, 0.0
      %v1425 = vsel %vm827, %v1423, 0.0
      %v1426 = vadd.f32 %v1424, %v1425
      %1427 = vadd.xlane.f32.xlu0 %v1426
      %v1428 = vpop.xlane.xlu0 %1427
      %v1429 = vmul.f32 %v1428, %v833
      %v1430 = vadd.f32 %v1429, 1e-05
      %v1431 = vrsqrt.pop %v1430
      %v1432 = vmul.f32 %v1420, %v1431
      %v1433 = vmul.f32 %v1421, %v1431
      %v1436 = vcombine.low %v1432, %v1433
      %v1438 = vadd.f32 %v199, %v1436
      %1439 = vst [vmem:[%s197] sm:$0xff] %v1438
      %p1440 = scmp.lt.s32.totalorder %s15, 1
      %s1441 = scalar_select %p1440, %s15, 1
      %s1442 = smul.addr %s1441, 2
      %s1443 = smul.addr %s1442, 4
      %s1444 = scalar_lea.vmem %s4, %s1443
      // Predicated region
      $region37: #{resblock.1} parent=35 // pred_check
        %p1445 = pneg %p122
      $region38: #{resblock.1} parent=35 // pred_check_branch
        %1447 = sbr.rel (%p1445) target = $region40
      $region39: #{resblock.1} parent=35 // pred_region
        _
      $region40: #{resblock.1} parent=35 // pred_fallthru
        _
    $region36: #{resblock.1} parent=5 // pred_fallthru
      _
    %p1448 = scmp.le.s32.totalorder 2, %s10
    // Predicated region
    $region41: #{resblock.1} parent=5 // pred_check
      %p1449 = pneg %p1448
    $region42: #{resblock.1} parent=5 // pred_check_branch
      %1451 = sbr.rel (%p1449) target = $region44
    $region43: #{resblock.1} parent=5 // pred_region
      %s1452 = ssub.s32 %s10, 2
      // Predicated region
      $region45: #{resblock.1} parent=43 // pred_check
        %p1453 = pneg %p128
      $region46: #{resblock.1} parent=43 // pred_check_branch
        %1455 = sbr.rel (%p1453) target = $region48
      $region47: #{resblock.1} parent=43 // pred_region
        %p1456 = scmp.lt.s32.totalorder %s16, 1
        %s1457 = scalar_select %p1456, %s16, 1
        %s1458 = smul.addr %s1457, 2
        %s1459 = smul.addr %s1458, 4
        %s1460 = scalar_lea.vmem %s4, %s1459
      $region48: #{resblock.1} parent=43 // pred_fallthru
        _
    $region44: #{resblock.1} parent=5 // pred_fallthru
      _
  $region6: #{resblock.1} parent=0 // loop_footer
    %s14 = sadd.s32 1, %s10
  $region7: #{resblock.1} parent=0 // loop_footer_branch
    %9 = sbr.rel target = $region3
  $region8: #{resblock.1} parent=0 // loop_exit
    _

</llo_original>
